<compile_context>
chip_gen: v5e
topology: v5e:2x2
jax: 0.10.0
libtpu: 0.0.40
codegen_flags: <defaults>
</compile_context>

<pallas_src>
import jax
import jax.numpy as jnp
from jax.experimental import pallas as pl
from jax.experimental.pallas import tpu as pltpu


VP = 128  # vocab projection padded to one full lane width


# ----------------------------- Pallas kernel -----------------------------

def _make_rvae_kernel(S, Td, Bp, B_real, H, L):
    """Fused encoder-LSTM / reparam+KLD / decoder-LSTM / vocab-proj kernel."""
    G = 4 * H  # fused gate width (= 128 lanes for H = 32)

    def kernel(enc_x_ref, enc_wih_ref, enc_whh_ref, enc_b_ref,
               mulv_w_ref, mulv_b_ref, eps_ref,
               dec_x_ref, dec_wih_w_ref, dec_wih_z_ref, dec_whh_ref, dec_b_ref,
               fc_w_ref, fc_b_ref,
               logits_ref, hc_kld_ref,
               enc_xw, dec_xw, h_all):
        f32 = jnp.float32
        bf16 = jnp.bfloat16

        # Hoisted lane mask selecting the g-gate 32-lane block of [i|f|g|o].
        lane = jax.lax.broadcasted_iota(jnp.int32, (Bp, G), 1)
        g_mask = (lane >= 2 * H) & (lane < 3 * H)

        def lstm_step(gates, c):
            # 2 full-vreg EUP pushes (sigmoid + tanh on [Bp, 4H]) instead of
            # four quarter-width ones; lane extracts go to the XLU slot.
            sig = jax.nn.sigmoid(gates)
            th = jnp.tanh(gates)
            act = jnp.where(g_mask, th, sig)
            i_g = act[:, 0:H]
            f_g = act[:, H:2 * H]
            g_g = act[:, 2 * H:3 * H]
            o_g = act[:, 3 * H:4 * H]
            c_new = f_g * c + i_g * g_g
            h_new = o_g * jnp.tanh(c_new)
            return h_new, c_new

        # ---------------- Encoder LSTM ----------------
        # Input projection hoisted out of the recurrence: one [S*Bp, D] x
        # [D, 4H] bf16 matmul (f32 accumulate); bias added once (lane-dense).
        enc_xw[...] = (jnp.dot(enc_x_ref[...], enc_wih_ref[...],
                               preferred_element_type=f32) + enc_b_ref[...])
        enc_whh = enc_whh_ref[...]          # bf16 [H, 4H], loaded once

        h = jnp.zeros((Bp, H), f32)
        c = jnp.zeros((Bp, H), f32)
        for t in range(S):  # static trip count -> fully unrolled
            gates = enc_xw[pl.ds(t * Bp, Bp), :] + jnp.dot(
                h.astype(bf16), enc_whh, preferred_element_type=f32)   # [Bp,4H]
            h, c = lstm_step(gates, c)

        context = h                          # encoder h_T

        # -------- mu / logvar (fused [H, 2L] matmul), reparam, KLD --------
        mulv = jnp.dot(context, mulv_w_ref[...],
                       preferred_element_type=f32) + mulv_b_ref[...]   # [Bp,2L]
        mu = mulv[:, 0:L]
        logvar = mulv[:, L:2 * L]
        std = jnp.exp(0.5 * logvar)
        z = eps_ref[...] * std + mu                                    # [Bp, L]

        # mask padded batch rows; torch reference sums over batch AND latent dims
        row = jax.lax.broadcasted_iota(jnp.int32, (Bp, L), 0)
        bmask = (row < B_real).astype(f32)
        term = (1.0 + logvar - mu * mu - jnp.exp(logvar)) * bmask
        kld = -0.5 * jnp.sum(term, axis=(0, 1), keepdims=True)         # [1, 1]

        # ---------------- Decoder input projection ----------------
        dec_whh = dec_whh_ref[...]          # bf16 [H, 4H]
        # z contribution (time-constant) + bias computed once and folded into
        # the hoisted input projection, OFF the recurrence critical path.
        zb = (jnp.dot(z.astype(bf16), dec_wih_z_ref[...],
                      preferred_element_type=f32) + dec_b_ref[...])    # [Bp,4H]
        dec_xw[...] = jnp.dot(dec_x_ref[...], dec_wih_w_ref[...],
                              preferred_element_type=f32)              # [Td*Bp,4H]
        for t in range(Td):
            dec_xw[pl.ds(t * Bp, Bp), :] = dec_xw[pl.ds(t * Bp, Bp), :] + zb

        # ---------------- Decoder recurrence ----------------
        # torch code seeds the decoder with the encoder final hidden state.
        h = context
        c = jnp.zeros((Bp, H), f32)
        for t in range(Td):
            gates = dec_xw[pl.ds(t * Bp, Bp), :] + jnp.dot(
                h.astype(bf16), dec_whh, preferred_element_type=f32)
            h, c = lstm_step(gates, c)
            h_all[pl.ds(t * Bp, Bp), :] = h   # cheap vst, off the MXU pop path

        # ---------------- Hoisted vocab projection ----------------
        # One batched [Td*Bp, H] x [H, VP] matmul + bias; single dense
        # [Td*Bp, 128] slab store (reshaped to (B, Td, V) in JAX).
        logits_ref[...] = (jnp.dot(h_all[...].astype(bf16), fc_w_ref[...],
                                   preferred_element_type=f32) + fc_b_ref[...])

        # ---------------- Packed, lane-dense epilogue ----------------
        # [h_T | c_T | broadcast(kld)] -> one unmasked [Bp, 128] store.
        hc_kld_ref[...] = jnp.concatenate(
            [h, c, jnp.broadcast_to(kld, (Bp, G - 2 * H))], axis=1)

    return kernel


# ----------------------------- Model definition -----------------------------

class Params:
    word_vocab_size = 40
    char_vocab_size = 20
    word_embed_size = 16
    char_embed_size = 8
    max_word_len = 6
    encoder_rnn_size = 32     # == decoder_rnn_size so encoder h_T can seed decoder
    decoder_rnn_size = 32
    latent_variable_size = 16
    decoder_num_layers = 1


def _normal(key, shape, scale=0.1):
    return (scale * jax.random.normal(key, shape)).astype(jnp.float32)


def init_weights(params, key):
    ks = jax.random.split(key, 11)
    H = params.encoder_rnn_size
    L = params.latent_variable_size
    enc_in = params.word_embed_size + params.char_embed_size
    w = {}
    w['word_embed'] = _normal(ks[0], (params.word_vocab_size, params.word_embed_size))
    w['char_embed'] = _normal(ks[1], (params.char_vocab_size, params.char_embed_size))
    # encoder LSTM, gates fused along the last dim: [i | f | g | o] -> 4H lanes
    # NOTE: single fused bias per LSTM; when porting trained torch weights,
    # b_ih and b_hh must be summed into this bias.
    w['enc_wih'] = _normal(ks[2], (enc_in, 4 * H))
    w['enc_whh'] = _normal(ks[3], (H, 4 * H))
    w['enc_b'] = _normal(ks[4], (1, 4 * H))
    # decoder LSTM; input projection split into word-embedding part and z part
    w['dec_wih_w'] = _normal(ks[5], (params.word_embed_size, 4 * H))
    w['dec_wih_z'] = _normal(ks[6], (L, 4 * H))
    w['dec_whh'] = _normal(ks[7], (H, 4 * H))
    w['dec_b'] = _normal(ks[8], (1, 4 * H))
    # context -> [mu | logvar] fused
    w['mulv_w'] = _normal(ks[9], (H, 2 * L))
    w['mulv_b'] = jnp.zeros((1, 2 * L), jnp.float32)
    # hidden -> vocab
    w['fc_w'] = _normal(ks[10], (H, params.word_vocab_size))
    w['fc_b'] = jnp.zeros((1, params.word_vocab_size), jnp.float32)
    return w


def rvae_forward(params, weights, drop_prob,
                 encoder_word_input, encoder_character_input,
                 decoder_word_input, rng):
    """Returns (logits [B,Td,V], final_state (h,c), kld, kld_local, nll_local)."""
    B, S = encoder_word_input.shape
    Td = decoder_word_input.shape[1]
    H = params.encoder_rnn_size
    L = params.latent_variable_size
    V = params.word_vocab_size
    Bp = max(8, ((B + 7) // 8) * 8)          # pad batch to sublane width
    bf16 = jnp.bfloat16

    # --- Embedding (JAX gathers) ---
    w_emb = weights['word_embed'][encoder_word_input]              # [B,S,We]
    c_emb = weights['char_embed'][encoder_character_input]         # [B,S,Lc,Ce]
    # TODO(synk): original Embedding runs a TDNN (char CNN) over character
    # embeddings; approximated here by a mean over the word's characters.
    c_emb = jnp.mean(c_emb, axis=2)                                # [B,S,Ce]
    enc_in = jnp.concatenate([w_emb, c_emb], axis=-1)              # [B,S,De]

    dec_emb = weights['word_embed'][decoder_word_input]            # [B,Td,We]
    if drop_prob > 0.0:
        # word-dropout on the embedding portion only
        keep = jax.random.bernoulli(jax.random.fold_in(rng, 1),
                                    1.0 - drop_prob, dec_emb.shape)
        dec_emb = jnp.where(keep, dec_emb / (1.0 - drop_prob), 0.0)

    # eps uses its own fold to avoid key reuse with the dropout draw
    eps = jax.random.normal(jax.random.fold_in(rng, 0), (B, L), jnp.float32)

    # --- pad batch, go time-major, flatten to [T*Bp, D]; bf16 matmul operands ---
    def pad_b(x):
        return jnp.pad(x, ((0, Bp - B),) + ((0, 0),) * (x.ndim - 1))

    enc_x = jnp.transpose(pad_b(enc_in), (1, 0, 2)).reshape(S * Bp, -1).astype(bf16)
    dec_x = jnp.transpose(pad_b(dec_emb), (1, 0, 2)).reshape(Td * Bp, -1).astype(bf16)
    eps_p = pad_b(eps)

    # pad vocab projection to 128 lanes (dense stores; padding sliced off below)
    fc_w = jnp.pad(weights['fc_w'], ((0, 0), (0, VP - V))).astype(bf16)
    fc_b = jnp.pad(weights['fc_b'], ((0, 0), (0, VP - V)))

    kernel = _make_rvae_kernel(S, Td, Bp, B, H, L)
    out_shapes = (
        jax.ShapeDtypeStruct((Td * Bp, VP), jnp.float32),   # logits slab (padded)
        jax.ShapeDtypeStruct((Bp, 4 * H), jnp.float32),     # packed [h | c | kld]
    )
    # No grid / BlockSpec pipelining on purpose: <0.5 MiB working set, the kernel
    # is latency-bound on the 17-step recurrence, not VMEM- or bandwidth-bound.
    logits_p, hc_kld = pl.pallas_call(
        kernel,
        out_shape=out_shapes,
        scratch_shapes=[pltpu.VMEM((S * Bp, 4 * H), jnp.float32),   # enc_xw
                        pltpu.VMEM((Td * Bp, 4 * H), jnp.float32),  # dec_xw
                        pltpu.VMEM((Td * Bp, H), jnp.float32)],     # h_all
    )(enc_x,
      weights['enc_wih'].astype(bf16), weights['enc_whh'].astype(bf16),
      weights['enc_b'],
      weights['mulv_w'], weights['mulv_b'], eps_p,
      dec_x,
      weights['dec_wih_w'].astype(bf16), weights['dec_wih_z'].astype(bf16),
      weights['dec_whh'].astype(bf16), weights['dec_b'],
      fc_w, fc_b)

    logits = logits_p.reshape(Td, Bp, VP).transpose(1, 0, 2)[:B, :, :V]  # [B,Td,V]
    h_T = hc_kld[:B, 0:H][None]                                          # [1,B,H]
    c_T = hc_kld[:B, H:2 * H][None]                                      # [1,B,H]
    kld = hc_kld[0, 2 * H]
    # TODO(synk): the non-VRNN Decoder has no local KL / NLL terms.
    kld_local = jnp.float32(0.0)
    nll_local = jnp.float32(0.0)
    return logits, (h_T, c_T), kld, kld_local, nll_local


# ----------------------------- Driver -----------------------------

if __name__ == "__main__":
    params = Params()
    B, S = 2, 8
    Td = S + 1                       # decoder_word_input: [B, max_seq_len + 1]
    Lc = params.max_word_len

    key = jax.random.PRNGKey(0)
    k_w, k_enc, k_chr, k_dec, k_eps = jax.random.split(key, 5)

    weights = init_weights(params, k_w)

    encoder_word_input = jax.random.randint(
        k_enc, (B, S), 0, params.word_vocab_size, dtype=jnp.int32)
    encoder_character_input = jax.random.randint(
        k_chr, (B, S, Lc), 0, params.char_vocab_size, dtype=jnp.int32)
    decoder_word_input = jax.random.randint(
        k_dec, (B, Td), 0, params.word_vocab_size, dtype=jnp.int32)

    fwd = jax.jit(rvae_forward, static_argnums=(0, 2))
    logits, final_state, kld, kld_local, nll_local = fwd(
        params, weights, 0.0,
        encoder_word_input, encoder_character_input, decoder_word_input, k_eps)

    jax.block_until_ready((logits, final_state, kld, kld_local, nll_local))

    assert logits.shape == (B, Td, params.word_vocab_size)
    assert final_state[0].shape == (1, B, params.decoder_rnn_size)
    assert final_state[1].shape == (1, B, params.decoder_rnn_size)
    assert bool(jnp.isfinite(kld))
    assert bool(jnp.all(jnp.isfinite(logits)))

    print("KERNEL_OK")
</pallas_src>

<mosaic_0001>
module attributes {stable_mosaic.version = 11 : i64} {
  func.func @kernel(%arg0: memref<64x24xbf16, #tpu.memory_space<vmem>>, %arg1: memref<24x128xbf16, #tpu.memory_space<vmem>>, %arg2: memref<32x128xbf16, #tpu.memory_space<vmem>>, %arg3: memref<1x128xf32, #tpu.memory_space<vmem>>, %arg4: memref<32x32xf32, #tpu.memory_space<vmem>>, %arg5: memref<1x32xf32, #tpu.memory_space<vmem>>, %arg6: memref<8x16xf32, #tpu.memory_space<vmem>>, %arg7: memref<72x16xbf16, #tpu.memory_space<vmem>>, %arg8: memref<16x128xbf16, #tpu.memory_space<vmem>>, %arg9: memref<16x128xbf16, #tpu.memory_space<vmem>>, %arg10: memref<32x128xbf16, #tpu.memory_space<vmem>>, %arg11: memref<1x128xf32, #tpu.memory_space<vmem>>, %arg12: memref<32x128xbf16, #tpu.memory_space<vmem>>, %arg13: memref<1x128xf32, #tpu.memory_space<vmem>>, %arg14: memref<72x128xf32, #tpu.memory_space<vmem>>, %arg15: memref<8x128xf32, #tpu.memory_space<vmem>>, %arg16: memref<64x128xf32, #tpu.memory_space<vmem>>, %arg17: memref<72x128xf32, #tpu.memory_space<vmem>>, %arg18: memref<72x32xf32, #tpu.memory_space<vmem>>) attributes {dimension_semantics = [], scalar_prefetch = 0 : i64, scratch_operands = 3 : i64, tpu.core_type = #tpu.core_type<tc>} {
    %0 = tpu.iota {dimensions = array<i32: 1>} : vector<8x128xi32>
    %c64_i32 = arith.constant 64 : i32
    %1 = vector.broadcast %c64_i32 : i32 to vector<8x128xi32>
    %2 = arith.cmpi sge, %0, %1 : vector<8x128xi32>
    %c96_i32 = arith.constant 96 : i32
    %3 = vector.broadcast %c96_i32 : i32 to vector<8x128xi32>
    %4 = arith.cmpi slt, %0, %3 : vector<8x128xi32>
    %5 = arith.andi %2, %4 : vector<8x128xi1>
    %c0 = arith.constant 0 : index
    %c0_0 = arith.constant 0 : index
    %6 = vector.load %arg0[%c0, %c0_0] : memref<64x24xbf16, #tpu.memory_space<vmem>>, vector<64x24xbf16>
    %c0_1 = arith.constant 0 : index
    %c0_2 = arith.constant 0 : index
    %7 = vector.load %arg1[%c0_1, %c0_2] : memref<24x128xbf16, #tpu.memory_space<vmem>>, vector<24x128xbf16>
    %cst = arith.constant dense<0.000000e+00> : vector<64x128xf32>
    %8 = tpu.matmul %6, %7, %cst {dimension_numbers = #tpu.dot_dimension_numbers<[1], [0], [0], [1], [0, 0, 1, 1], [], []>} : vector<64x24xbf16>, vector<24x128xbf16>, vector<64x128xf32> -> vector<64x128xf32>
    %c0_3 = arith.constant 0 : index
    %c0_4 = arith.constant 0 : index
    %9 = vector.load %arg3[%c0_3, %c0_4] : memref<1x128xf32, #tpu.memory_space<vmem>>, vector<1x128xf32>
    %10 = vector.broadcast %9 : vector<1x128xf32> to vector<64x128xf32>
    %11 = arith.addf %8, %10 : vector<64x128xf32>
    %c0_5 = arith.constant 0 : index
    %c0_6 = arith.constant 0 : index
    %12 = vector.load %arg16[%c0_5, %c0_6] : memref<64x128xf32, #tpu.memory_space<vmem>>, vector<64x128xf32>
    tpu.vector_store %arg16[%c0_5, %c0_6], %11 {strides = array<i32>} : memref<64x128xf32, #tpu.memory_space<vmem>>, vector<64x128xf32>,
    %c0_7 = arith.constant 0 : index
    %c0_8 = arith.constant 0 : index
    %13 = vector.load %arg2[%c0_7, %c0_8] : memref<32x128xbf16, #tpu.memory_space<vmem>>, vector<32x128xbf16>
    %cst_9 = arith.constant 0.000000e+00 : f32
    %14 = vector.broadcast %cst_9 : f32 to vector<8x32xf32>
    %cst_10 = arith.constant 0.000000e+00 : f32
    %15 = vector.broadcast %cst_10 : f32 to vector<8x32xf32>
    %c0_11 = arith.constant 0 : index
    %c0_12 = arith.constant 0 : index
    %16 = vector.load %arg16[%c0_11, %c0_12] : memref<64x128xf32, #tpu.memory_space<vmem>>, vector<8x128xf32>
    %17 = arith.truncf %14 : vector<8x32xf32> to vector<8x32xbf16>
    %cst_13 = arith.constant dense<0.000000e+00> : vector<8x128xf32>
    %18 = tpu.matmul %17, %13, %cst_13 {dimension_numbers = #tpu.dot_dimension_numbers<[1], [0], [0], [1], [0, 0, 1, 1], [], []>} : vector<8x32xbf16>, vector<32x128xbf16>, vector<8x128xf32> -> vector<8x128xf32>
    %19 = arith.addf %16, %18 : vector<8x128xf32>
    %20 = arith.negf %19 : vector<8x128xf32>
    %21 = math.exp %20 : vector<8x128xf32>
    %cst_14 = arith.constant 1.000000e+00 : f32
    %22 = vector.broadcast %cst_14 : f32 to vector<8x128xf32>
    %23 = arith.addf %22, %21 : vector<8x128xf32>
    %24 = arith.divf %22, %23 : vector<8x128xf32>
    %25 = math.tanh %19 : vector<8x128xf32>
    %26 = arith.select %5, %25, %24 : vector<8x128xi1>, vector<8x128xf32>
    %27 = vector.extract_strided_slice %26 {offsets = [0, 0], sizes = [8, 32], strides = [1, 1]} : vector<8x128xf32> to vector<8x32xf32>
    %28 = vector.extract_strided_slice %26 {offsets = [0, 32], sizes = [8, 32], strides = [1, 1]} : vector<8x128xf32> to vector<8x32xf32>
    %29 = vector.extract_strided_slice %26 {offsets = [0, 64], sizes = [8, 32], strides = [1, 1]} : vector<8x128xf32> to vector<8x32xf32>
    %30 = vector.extract_strided_slice %26 {offsets = [0, 96], sizes = [8, 32], strides = [1, 1]} : vector<8x128xf32> to vector<8x32xf32>
    %31 = arith.mulf %28, %15 : vector<8x32xf32>
    %32 = arith.mulf %27, %29 : vector<8x32xf32>
    %33 = arith.addf %31, %32 : vector<8x32xf32>
    %34 = math.tanh %33 : vector<8x32xf32>
    %35 = arith.mulf %30, %34 : vector<8x32xf32>
    %c8 = arith.constant 8 : index
    %c0_15 = arith.constant 0 : index
    %36 = vector.load %arg16[%c8, %c0_15] : memref<64x128xf32, #tpu.memory_space<vmem>>, vector<8x128xf32>
    %37 = arith.truncf %35 : vector<8x32xf32> to vector<8x32xbf16>
    %cst_16 = arith.constant dense<0.000000e+00> : vector<8x128xf32>
    %38 = tpu.matmul %37, %13, %cst_16 {dimension_numbers = #tpu.dot_dimension_numbers<[1], [0], [0], [1], [0, 0, 1, 1], [], []>} : vector<8x32xbf16>, vector<32x128xbf16>, vector<8x128xf32> -> vector<8x128xf32>
    %39 = arith.addf %36, %38 : vector<8x128xf32>
    %40 = arith.negf %39 : vector<8x128xf32>
    %41 = math.exp %40 : vector<8x128xf32>
    %cst_17 = arith.constant 1.000000e+00 : f32
    %42 = vector.broadcast %cst_17 : f32 to vector<8x128xf32>
    %43 = arith.addf %42, %41 : vector<8x128xf32>
    %44 = arith.divf %42, %43 : vector<8x128xf32>
    %45 = math.tanh %39 : vector<8x128xf32>
    %46 = arith.select %5, %45, %44 : vector<8x128xi1>, vector<8x128xf32>
    %47 = vector.extract_strided_slice %46 {offsets = [0, 0], sizes = [8, 32], strides = [1, 1]} : vector<8x128xf32> to vector<8x32xf32>
    %48 = vector.extract_strided_slice %46 {offsets = [0, 32], sizes = [8, 32], strides = [1, 1]} : vector<8x128xf32> to vector<8x32xf32>
    %49 = vector.extract_strided_slice %46 {offsets = [0, 64], sizes = [8, 32], strides = [1, 1]} : vector<8x128xf32> to vector<8x32xf32>
    %50 = vector.extract_strided_slice %46 {offsets = [0, 96], sizes = [8, 32], strides = [1, 1]} : vector<8x128xf32> to vector<8x32xf32>
    %51 = arith.mulf %48, %33 : vector<8x32xf32>
    %52 = arith.mulf %47, %49 : vector<8x32xf32>
    %53 = arith.addf %51, %52 : vector<8x32xf32>
    %54 = math.tanh %53 : vector<8x32xf32>
    %55 = arith.mulf %50, %54 : vector<8x32xf32>
    %c16 = arith.constant 16 : index
    %c0_18 = arith.constant 0 : index
    %56 = vector.load %arg16[%c16, %c0_18] : memref<64x128xf32, #tpu.memory_space<vmem>>, vector<8x128xf32>
    %57 = arith.truncf %55 : vector<8x32xf32> to vector<8x32xbf16>
    %cst_19 = arith.constant dense<0.000000e+00> : vector<8x128xf32>
    %58 = tpu.matmul %57, %13, %cst_19 {dimension_numbers = #tpu.dot_dimension_numbers<[1], [0], [0], [1], [0, 0, 1, 1], [], []>} : vector<8x32xbf16>, vector<32x128xbf16>, vector<8x128xf32> -> vector<8x128xf32>
    %59 = arith.addf %56, %58 : vector<8x128xf32>
    %60 = arith.negf %59 : vector<8x128xf32>
    %61 = math.exp %60 : vector<8x128xf32>
    %cst_20 = arith.constant 1.000000e+00 : f32
    %62 = vector.broadcast %cst_20 : f32 to vector<8x128xf32>
    %63 = arith.addf %62, %61 : vector<8x128xf32>
    %64 = arith.divf %62, %63 : vector<8x128xf32>
    %65 = math.tanh %59 : vector<8x128xf32>
    %66 = arith.select %5, %65, %64 : vector<8x128xi1>, vector<8x128xf32>
    %67 = vector.extract_strided_slice %66 {offsets = [0, 0], sizes = [8, 32], strides = [1, 1]} : vector<8x128xf32> to vector<8x32xf32>
    %68 = vector.extract_strided_slice %66 {offsets = [0, 32], sizes = [8, 32], strides = [1, 1]} : vector<8x128xf32> to vector<8x32xf32>
    %69 = vector.extract_strided_slice %66 {offsets = [0, 64], sizes = [8, 32], strides = [1, 1]} : vector<8x128xf32> to vector<8x32xf32>
    %70 = vector.extract_strided_slice %66 {offsets = [0, 96], sizes = [8, 32], strides = [1, 1]} : vector<8x128xf32> to vector<8x32xf32>
    %71 = arith.mulf %68, %53 : vector<8x32xf32>
    %72 = arith.mulf %67, %69 : vector<8x32xf32>
    %73 = arith.addf %71, %72 : vector<8x32xf32>
    %74 = math.tanh %73 : vector<8x32xf32>
    %75 = arith.mulf %70, %74 : vector<8x32xf32>
    %c24 = arith.constant 24 : index
    %c0_21 = arith.constant 0 : index
    %76 = vector.load %arg16[%c24, %c0_21] : memref<64x128xf32, #tpu.memory_space<vmem>>, vector<8x128xf32>
    %77 = arith.truncf %75 : vector<8x32xf32> to vector<8x32xbf16>
    %cst_22 = arith.constant dense<0.000000e+00> : vector<8x128xf32>
    %78 = tpu.matmul %77, %13, %cst_22 {dimension_numbers = #tpu.dot_dimension_numbers<[1], [0], [0], [1], [0, 0, 1, 1], [], []>} : vector<8x32xbf16>, vector<32x128xbf16>, vector<8x128xf32> -> vector<8x128xf32>
    %79 = arith.addf %76, %78 : vector<8x128xf32>
    %80 = arith.negf %79 : vector<8x128xf32>
    %81 = math.exp %80 : vector<8x128xf32>
    %cst_23 = arith.constant 1.000000e+00 : f32
    %82 = vector.broadcast %cst_23 : f32 to vector<8x128xf32>
    %83 = arith.addf %82, %81 : vector<8x128xf32>
    %84 = arith.divf %82, %83 : vector<8x128xf32>
    %85 = math.tanh %79 : vector<8x128xf32>
    %86 = arith.select %5, %85, %84 : vector<8x128xi1>, vector<8x128xf32>
    %87 = vector.extract_strided_slice %86 {offsets = [0, 0], sizes = [8, 32], strides = [1, 1]} : vector<8x128xf32> to vector<8x32xf32>
    %88 = vector.extract_strided_slice %86 {offsets = [0, 32], sizes = [8, 32], strides = [1, 1]} : vector<8x128xf32> to vector<8x32xf32>
    %89 = vector.extract_strided_slice %86 {offsets = [0, 64], sizes = [8, 32], strides = [1, 1]} : vector<8x128xf32> to vector<8x32xf32>
    %90 = vector.extract_strided_slice %86 {offsets = [0, 96], sizes = [8, 32], strides = [1, 1]} : vector<8x128xf32> to vector<8x32xf32>
    %91 = arith.mulf %88, %73 : vector<8x32xf32>
    %92 = arith.mulf %87, %89 : vector<8x32xf32>
    %93 = arith.addf %91, %92 : vector<8x32xf32>
    %94 = math.tanh %93 : vector<8x32xf32>
    %95 = arith.mulf %90, %94 : vector<8x32xf32>
    %c32 = arith.constant 32 : index
    %c0_24 = arith.constant 0 : index
    %96 = vector.load %arg16[%c32, %c0_24] : memref<64x128xf32, #tpu.memory_space<vmem>>, vector<8x128xf32>
    %97 = arith.truncf %95 : vector<8x32xf32> to vector<8x32xbf16>
    %cst_25 = arith.constant dense<0.000000e+00> : vector<8x128xf32>
    %98 = tpu.matmul %97, %13, %cst_25 {dimension_numbers = #tpu.dot_dimension_numbers<[1], [0], [0], [1], [0, 0, 1, 1], [], []>} : vector<8x32xbf16>, vector<32x128xbf16>, vector<8x128xf32> -> vector<8x128xf32>
    %99 = arith.addf %96, %98 : vector<8x128xf32>
    %100 = arith.negf %99 : vector<8x128xf32>
    %101 = math.exp %100 : vector<8x128xf32>
    %cst_26 = arith.constant 1.000000e+00 : f32
    %102 = vector.broadcast %cst_26 : f32 to vector<8x128xf32>
    %103 = arith.addf %102, %101 : vector<8x128xf32>
    %104 = arith.divf %102, %103 : vector<8x128xf32>
    %105 = math.tanh %99 : vector<8x128xf32>
    %106 = arith.select %5, %105, %104 : vector<8x128xi1>, vector<8x128xf32>
    %107 = vector.extract_strided_slice %106 {offsets = [0, 0], sizes = [8, 32], strides = [1, 1]} : vector<8x128xf32> to vector<8x32xf32>
    %108 = vector.extract_strided_slice %106 {offsets = [0, 32], sizes = [8, 32], strides = [1, 1]} : vector<8x128xf32> to vector<8x32xf32>
    %109 = vector.extract_strided_slice %106 {offsets = [0, 64], sizes = [8, 32], strides = [1, 1]} : vector<8x128xf32> to vector<8x32xf32>
    %110 = vector.extract_strided_slice %106 {offsets = [0, 96], sizes = [8, 32], strides = [1, 1]} : vector<8x128xf32> to vector<8x32xf32>
    %111 = arith.mulf %108, %93 : vector<8x32xf32>
    %112 = arith.mulf %107, %109 : vector<8x32xf32>
    %113 = arith.addf %111, %112 : vector<8x32xf32>
    %114 = math.tanh %113 : vector<8x32xf32>
    %115 = arith.mulf %110, %114 : vector<8x32xf32>
    %c40 = arith.constant 40 : index
    %c0_27 = arith.constant 0 : index
    %116 = vector.load %arg16[%c40, %c0_27] : memref<64x128xf32, #tpu.memory_space<vmem>>, vector<8x128xf32>
    %117 = arith.truncf %115 : vector<8x32xf32> to vector<8x32xbf16>
    %cst_28 = arith.constant dense<0.000000e+00> : vector<8x128xf32>
    %118 = tpu.matmul %117, %13, %cst_28 {dimension_numbers = #tpu.dot_dimension_numbers<[1], [0], [0], [1], [0, 0, 1, 1], [], []>} : vector<8x32xbf16>, vector<32x128xbf16>, vector<8x128xf32> -> vector<8x128xf32>
    %119 = arith.addf %116, %118 : vector<8x128xf32>
    %120 = arith.negf %119 : vector<8x128xf32>
    %121 = math.exp %120 : vector<8x128xf32>
    %cst_29 = arith.constant 1.000000e+00 : f32
    %122 = vector.broadcast %cst_29 : f32 to vector<8x128xf32>
    %123 = arith.addf %122, %121 : vector<8x128xf32>
    %124 = arith.divf %122, %123 : vector<8x128xf32>
    %125 = math.tanh %119 : vector<8x128xf32>
    %126 = arith.select %5, %125, %124 : vector<8x128xi1>, vector<8x128xf32>
    %127 = vector.extract_strided_slice %126 {offsets = [0, 0], sizes = [8, 32], strides = [1, 1]} : vector<8x128xf32> to vector<8x32xf32>
    %128 = vector.extract_strided_slice %126 {offsets = [0, 32], sizes = [8, 32], strides = [1, 1]} : vector<8x128xf32> to vector<8x32xf32>
    %129 = vector.extract_strided_slice %126 {offsets = [0, 64], sizes = [8, 32], strides = [1, 1]} : vector<8x128xf32> to vector<8x32xf32>
    %130 = vector.extract_strided_slice %126 {offsets = [0, 96], sizes = [8, 32], strides = [1, 1]} : vector<8x128xf32> to vector<8x32xf32>
    %131 = arith.mulf %128, %113 : vector<8x32xf32>
    %132 = arith.mulf %127, %129 : vector<8x32xf32>
    %133 = arith.addf %131, %132 : vector<8x32xf32>
    %134 = math.tanh %133 : vector<8x32xf32>
    %135 = arith.mulf %130, %134 : vector<8x32xf32>
    %c48 = arith.constant 48 : index
    %c0_30 = arith.constant 0 : index
    %136 = vector.load %arg16[%c48, %c0_30] : memref<64x128xf32, #tpu.memory_space<vmem>>, vector<8x128xf32>
    %137 = arith.truncf %135 : vector<8x32xf32> to vector<8x32xbf16>
    %cst_31 = arith.constant dense<0.000000e+00> : vector<8x128xf32>
    %138 = tpu.matmul %137, %13, %cst_31 {dimension_numbers = #tpu.dot_dimension_numbers<[1], [0], [0], [1], [0, 0, 1, 1], [], []>} : vector<8x32xbf16>, vector<32x128xbf16>, vector<8x128xf32> -> vector<8x128xf32>
    %139 = arith.addf %136, %138 : vector<8x128xf32>
    %140 = arith.negf %139 : vector<8x128xf32>
    %141 = math.exp %140 : vector<8x128xf32>
    %cst_32 = arith.constant 1.000000e+00 : f32
    %142 = vector.broadcast %cst_32 : f32 to vector<8x128xf32>
    %143 = arith.addf %142, %141 : vector<8x128xf32>
    %144 = arith.divf %142, %143 : vector<8x128xf32>
    %145 = math.tanh %139 : vector<8x128xf32>
    %146 = arith.select %5, %145, %144 : vector<8x128xi1>, vector<8x128xf32>
    %147 = vector.extract_strided_slice %146 {offsets = [0, 0], sizes = [8, 32], strides = [1, 1]} : vector<8x128xf32> to vector<8x32xf32>
    %148 = vector.extract_strided_slice %146 {offsets = [0, 32], sizes = [8, 32], strides = [1, 1]} : vector<8x128xf32> to vector<8x32xf32>
    %149 = vector.extract_strided_slice %146 {offsets = [0, 64], sizes = [8, 32], strides = [1, 1]} : vector<8x128xf32> to vector<8x32xf32>
    %150 = vector.extract_strided_slice %146 {offsets = [0, 96], sizes = [8, 32], strides = [1, 1]} : vector<8x128xf32> to vector<8x32xf32>
    %151 = arith.mulf %148, %133 : vector<8x32xf32>
    %152 = arith.mulf %147, %149 : vector<8x32xf32>
    %153 = arith.addf %151, %152 : vector<8x32xf32>
    %154 = math.tanh %153 : vector<8x32xf32>
    %155 = arith.mulf %150, %154 : vector<8x32xf32>
    %c56 = arith.constant 56 : index
    %c0_33 = arith.constant 0 : index
    %156 = vector.load %arg16[%c56, %c0_33] : memref<64x128xf32, #tpu.memory_space<vmem>>, vector<8x128xf32>
    %157 = arith.truncf %155 : vector<8x32xf32> to vector<8x32xbf16>
    %cst_34 = arith.constant dense<0.000000e+00> : vector<8x128xf32>
    %158 = tpu.matmul %157, %13, %cst_34 {dimension_numbers = #tpu.dot_dimension_numbers<[1], [0], [0], [1], [0, 0, 1, 1], [], []>} : vector<8x32xbf16>, vector<32x128xbf16>, vector<8x128xf32> -> vector<8x128xf32>
    %159 = arith.addf %156, %158 : vector<8x128xf32>
    %160 = arith.negf %159 : vector<8x128xf32>
    %161 = math.exp %160 : vector<8x128xf32>
    %cst_35 = arith.constant 1.000000e+00 : f32
    %162 = vector.broadcast %cst_35 : f32 to vector<8x128xf32>
    %163 = arith.addf %162, %161 : vector<8x128xf32>
    %164 = arith.divf %162, %163 : vector<8x128xf32>
    %165 = math.tanh %159 : vector<8x128xf32>
    %166 = arith.select %5, %165, %164 : vector<8x128xi1>, vector<8x128xf32>
    %167 = vector.extract_strided_slice %166 {offsets = [0, 0], sizes = [8, 32], strides = [1, 1]} : vector<8x128xf32> to vector<8x32xf32>
    %168 = vector.extract_strided_slice %166 {offsets = [0, 32], sizes = [8, 32], strides = [1, 1]} : vector<8x128xf32> to vector<8x32xf32>
    %169 = vector.extract_strided_slice %166 {offsets = [0, 64], sizes = [8, 32], strides = [1, 1]} : vector<8x128xf32> to vector<8x32xf32>
    %170 = vector.extract_strided_slice %166 {offsets = [0, 96], sizes = [8, 32], strides = [1, 1]} : vector<8x128xf32> to vector<8x32xf32>
    %171 = arith.mulf %168, %153 : vector<8x32xf32>
    %172 = arith.mulf %167, %169 : vector<8x32xf32>
    %173 = arith.addf %171, %172 : vector<8x32xf32>
    %174 = math.tanh %173 : vector<8x32xf32>
    %175 = arith.mulf %170, %174 : vector<8x32xf32>
    %c0_36 = arith.constant 0 : index
    %c0_37 = arith.constant 0 : index
    %176 = vector.load %arg4[%c0_36, %c0_37] : memref<32x32xf32, #tpu.memory_space<vmem>>, vector<32x32xf32>
    %cst_38 = arith.constant dense<0.000000e+00> : vector<8x32xf32>
    %177 = tpu.matmul %175, %176, %cst_38 {dimension_numbers = #tpu.dot_dimension_numbers<[1], [0], [0], [1], [0, 0, 1, 1], [], []>} : vector<8x32xf32>, vector<32x32xf32>, vector<8x32xf32> -> vector<8x32xf32>
    %c0_39 = arith.constant 0 : index
    %c0_40 = arith.constant 0 : index
    %178 = vector.load %arg5[%c0_39, %c0_40] : memref<1x32xf32, #tpu.memory_space<vmem>>, vector<1x32xf32>
    %179 = vector.broadcast %178 : vector<1x32xf32> to vector<8x32xf32>
    %180 = arith.addf %177, %179 : vector<8x32xf32>
    %181 = vector.extract_strided_slice %180 {offsets = [0, 0], sizes = [8, 16], strides = [1, 1]} : vector<8x32xf32> to vector<8x16xf32>
    %182 = vector.extract_strided_slice %180 {offsets = [0, 16], sizes = [8, 16], strides = [1, 1]} : vector<8x32xf32> to vector<8x16xf32>
    %cst_41 = arith.constant 5.000000e-01 : f32
    %183 = vector.broadcast %cst_41 : f32 to vector<8x16xf32>
    %184 = arith.mulf %183, %182 : vector<8x16xf32>
    %185 = math.exp %184 : vector<8x16xf32>
    %c0_42 = arith.constant 0 : index
    %c0_43 = arith.constant 0 : index
    %186 = vector.load %arg6[%c0_42, %c0_43] : memref<8x16xf32, #tpu.memory_space<vmem>>, vector<8x16xf32>
    %187 = arith.mulf %186, %185 : vector<8x16xf32>
    %188 = arith.addf %187, %181 : vector<8x16xf32>
    %189 = tpu.iota {dimensions = array<i32: 0>} : vector<8x16xi32>
    %c2_i32 = arith.constant 2 : i32
    %190 = vector.broadcast %c2_i32 : i32 to vector<8x16xi32>
    %191 = arith.cmpi slt, %189, %190 : vector<8x16xi32>
    %192 = arith.extui %191 : vector<8x16xi1> to vector<8x16xi32>
    %193 = arith.sitofp %192 : vector<8x16xi32> to vector<8x16xf32>
    %cst_44 = arith.constant 1.000000e+00 : f32
    %194 = vector.broadcast %cst_44 : f32 to vector<8x16xf32>
    %195 = arith.addf %194, %182 : vector<8x16xf32>
    %196 = arith.mulf %181, %181 : vector<8x16xf32>
    %197 = arith.subf %195, %196 : vector<8x16xf32>
    %198 = math.exp %182 : vector<8x16xf32>
    %199 = arith.subf %197, %198 : vector<8x16xf32>
    %200 = arith.mulf %199, %193 : vector<8x16xf32>
    %201 = vector.shape_cast %200 : vector<8x16xf32> to vector<1x8x16xf32>
    %cst_45 = arith.constant dense<0.000000e+00> : vector<1xf32>
    %202 = vector.multi_reduction <add>, %201, %cst_45 [1, 2] : vector<1x8x16xf32> to vector<1xf32>
    %203 = vector.shape_cast %202 : vector<1xf32> to vector<1x1x1xf32>
    %204 = vector.extract %203[0, 0, 0] : f32 from vector<1x1x1xf32>
    %205 = vector.broadcast %204 : f32 to vector<1x1xf32>
    %cst_46 = arith.constant -5.000000e-01 : f32
    %206 = vector.broadcast %cst_46 : f32 to vector<1x1xf32>
    %207 = arith.mulf %206, %205 : vector<1x1xf32>
    %c0_47 = arith.constant 0 : index
    %c0_48 = arith.constant 0 : index
    %208 = vector.load %arg10[%c0_47, %c0_48] : memref<32x128xbf16, #tpu.memory_space<vmem>>, vector<32x128xbf16>
    %209 = arith.truncf %188 : vector<8x16xf32> to vector<8x16xbf16>
    %c0_49 = arith.constant 0 : index
    %c0_50 = arith.constant 0 : index
    %210 = vector.load %arg9[%c0_49, %c0_50] : memref<16x128xbf16, #tpu.memory_space<vmem>>, vector<16x128xbf16>
    %cst_51 = arith.constant dense<0.000000e+00> : vector<8x128xf32>
    %211 = tpu.matmul %209, %210, %cst_51 {dimension_numbers = #tpu.dot_dimension_numbers<[1], [0], [0], [1], [0, 0, 1, 1], [], []>} : vector<8x16xbf16>, vector<16x128xbf16>, vector<8x128xf32> -> vector<8x128xf32>
    %c0_52 = arith.constant 0 : index
    %c0_53 = arith.constant 0 : index
    %212 = vector.load %arg11[%c0_52, %c0_53] : memref<1x128xf32, #tpu.memory_space<vmem>>, vector<1x128xf32>
    %213 = vector.broadcast %212 : vector<1x128xf32> to vector<8x128xf32>
    %214 = arith.addf %211, %213 : vector<8x128xf32>
    %c0_54 = arith.constant 0 : index
    %c0_55 = arith.constant 0 : index
    %215 = vector.load %arg7[%c0_54, %c0_55] : memref<72x16xbf16, #tpu.memory_space<vmem>>, vector<72x16xbf16>
    %c0_56 = arith.constant 0 : index
    %c0_57 = arith.constant 0 : index
    %216 = vector.load %arg8[%c0_56, %c0_57] : memref<16x128xbf16, #tpu.memory_space<vmem>>, vector<16x128xbf16>
    %cst_58 = arith.constant dense<0.000000e+00> : vector<72x128xf32>
    %217 = tpu.matmul %215, %216, %cst_58 {dimension_numbers = #tpu.dot_dimension_numbers<[1], [0], [0], [1], [0, 0, 1, 1], [], []>} : vector<72x16xbf16>, vector<16x128xbf16>, vector<72x128xf32> -> vector<72x128xf32>
    %c0_59 = arith.constant 0 : index
    %c0_60 = arith.constant 0 : index
    %218 = vector.load %arg17[%c0_59, %c0_60] : memref<72x128xf32, #tpu.memory_space<vmem>>, vector<72x128xf32>
    tpu.vector_store %arg17[%c0_59, %c0_60], %217 {strides = array<i32>} : memref<72x128xf32, #tpu.memory_space<vmem>>, vector<72x128xf32>,
    %c0_61 = arith.constant 0 : index
    %c0_62 = arith.constant 0 : index
    %219 = vector.load %arg17[%c0_61, %c0_62] : memref<72x128xf32, #tpu.memory_space<vmem>>, vector<8x128xf32>
    %220 = arith.addf %219, %214 : vector<8x128xf32>
    %c0_63 = arith.constant 0 : index
    %c0_64 = arith.constant 0 : index
    %221 = vector.load %arg17[%c0_63, %c0_64] : memref<72x128xf32, #tpu.memory_space<vmem>>, vector<8x128xf32>
    tpu.vector_store %arg17[%c0_63, %c0_64], %220 {strides = array<i32>} : memref<72x128xf32, #tpu.memory_space<vmem>>, vector<8x128xf32>,
    %c8_65 = arith.constant 8 : index
    %c0_66 = arith.constant 0 : index
    %222 = vector.load %arg17[%c8_65, %c0_66] : memref<72x128xf32, #tpu.memory_space<vmem>>, vector<8x128xf32>
    %223 = arith.addf %222, %214 : vector<8x128xf32>
    %c8_67 = arith.constant 8 : index
    %c0_68 = arith.constant 0 : index
    %224 = vector.load %arg17[%c8_67, %c0_68] : memref<72x128xf32, #tpu.memory_space<vmem>>, vector<8x128xf32>
    tpu.vector_store %arg17[%c8_67, %c0_68], %223 {strides = array<i32>} : memref<72x128xf32, #tpu.memory_space<vmem>>, vector<8x128xf32>,
    %c16_69 = arith.constant 16 : index
    %c0_70 = arith.constant 0 : index
    %225 = vector.load %arg17[%c16_69, %c0_70] : memref<72x128xf32, #tpu.memory_space<vmem>>, vector<8x128xf32>
    %226 = arith.addf %225, %214 : vector<8x128xf32>
    %c16_71 = arith.constant 16 : index
    %c0_72 = arith.constant 0 : index
    %227 = vector.load %arg17[%c16_71, %c0_72] : memref<72x128xf32, #tpu.memory_space<vmem>>, vector<8x128xf32>
    tpu.vector_store %arg17[%c16_71, %c0_72], %226 {strides = array<i32>} : memref<72x128xf32, #tpu.memory_space<vmem>>, vector<8x128xf32>,
    %c24_73 = arith.constant 24 : index
    %c0_74 = arith.constant 0 : index
    %228 = vector.load %arg17[%c24_73, %c0_74] : memref<72x128xf32, #tpu.memory_space<vmem>>, vector<8x128xf32>
    %229 = arith.addf %228, %214 : vector<8x128xf32>
    %c24_75 = arith.constant 24 : index
    %c0_76 = arith.constant 0 : index
    %230 = vector.load %arg17[%c24_75, %c0_76] : memref<72x128xf32, #tpu.memory_space<vmem>>, vector<8x128xf32>
    tpu.vector_store %arg17[%c24_75, %c0_76], %229 {strides = array<i32>} : memref<72x128xf32, #tpu.memory_space<vmem>>, vector<8x128xf32>,
    %c32_77 = arith.constant 32 : index
    %c0_78 = arith.constant 0 : index
    %231 = vector.load %arg17[%c32_77, %c0_78] : memref<72x128xf32, #tpu.memory_space<vmem>>, vector<8x128xf32>
    %232 = arith.addf %231, %214 : vector<8x128xf32>
    %c32_79 = arith.constant 32 : index
    %c0_80 = arith.constant 0 : index
    %233 = vector.load %arg17[%c32_79, %c0_80] : memref<72x128xf32, #tpu.memory_space<vmem>>, vector<8x128xf32>
    tpu.vector_store %arg17[%c32_79, %c0_80], %232 {strides = array<i32>} : memref<72x128xf32, #tpu.memory_space<vmem>>, vector<8x128xf32>,
    %c40_81 = arith.constant 40 : index
    %c0_82 = arith.constant 0 : index
    %234 = vector.load %arg17[%c40_81, %c0_82] : memref<72x128xf32, #tpu.memory_space<vmem>>, vector<8x128xf32>
    %235 = arith.addf %234, %214 : vector<8x128xf32>
    %c40_83 = arith.constant 40 : index
    %c0_84 = arith.constant 0 : index
    %236 = vector.load %arg17[%c40_83, %c0_84] : memref<72x128xf32, #tpu.memory_space<vmem>>, vector<8x128xf32>
    tpu.vector_store %arg17[%c40_83, %c0_84], %235 {strides = array<i32>} : memref<72x128xf32, #tpu.memory_space<vmem>>, vector<8x128xf32>,
    %c48_85 = arith.constant 48 : index
    %c0_86 = arith.constant 0 : index
    %237 = vector.load %arg17[%c48_85, %c0_86] : memref<72x128xf32, #tpu.memory_space<vmem>>, vector<8x128xf32>
    %238 = arith.addf %237, %214 : vector<8x128xf32>
    %c48_87 = arith.constant 48 : index
    %c0_88 = arith.constant 0 : index
    %239 = vector.load %arg17[%c48_87, %c0_88] : memref<72x128xf32, #tpu.memory_space<vmem>>, vector<8x128xf32>
    tpu.vector_store %arg17[%c48_87, %c0_88], %238 {strides = array<i32>} : memref<72x128xf32, #tpu.memory_space<vmem>>, vector<8x128xf32>,
    %c56_89 = arith.constant 56 : index
    %c0_90 = arith.constant 0 : index
    %240 = vector.load %arg17[%c56_89, %c0_90] : memref<72x128xf32, #tpu.memory_space<vmem>>, vector<8x128xf32>
    %241 = arith.addf %240, %214 : vector<8x128xf32>
    %c56_91 = arith.constant 56 : index
    %c0_92 = arith.constant 0 : index
    %242 = vector.load %arg17[%c56_91, %c0_92] : memref<72x128xf32, #tpu.memory_space<vmem>>, vector<8x128xf32>
    tpu.vector_store %arg17[%c56_91, %c0_92], %241 {strides = array<i32>} : memref<72x128xf32, #tpu.memory_space<vmem>>, vector<8x128xf32>,
    %c64 = arith.constant 64 : index
    %c0_93 = arith.constant 0 : index
    %243 = vector.load %arg17[%c64, %c0_93] : memref<72x128xf32, #tpu.memory_space<vmem>>, vector<8x128xf32>
    %244 = arith.addf %243, %214 : vector<8x128xf32>
    %c64_94 = arith.constant 64 : index
    %c0_95 = arith.constant 0 : index
    %245 = vector.load %arg17[%c64_94, %c0_95] : memref<72x128xf32, #tpu.memory_space<vmem>>, vector<8x128xf32>
    tpu.vector_store %arg17[%c64_94, %c0_95], %244 {strides = array<i32>} : memref<72x128xf32, #tpu.memory_space<vmem>>, vector<8x128xf32>,
    %cst_96 = arith.constant 0.000000e+00 : f32
    %246 = vector.broadcast %cst_96 : f32 to vector<8x32xf32>
    %c0_97 = arith.constant 0 : index
    %c0_98 = arith.constant 0 : index
    %247 = vector.load %arg17[%c0_97, %c0_98] : memref<72x128xf32, #tpu.memory_space<vmem>>, vector<8x128xf32>
    %248 = arith.truncf %175 : vector<8x32xf32> to vector<8x32xbf16>
    %cst_99 = arith.constant dense<0.000000e+00> : vector<8x128xf32>
    %249 = tpu.matmul %248, %208, %cst_99 {dimension_numbers = #tpu.dot_dimension_numbers<[1], [0], [0], [1], [0, 0, 1, 1], [], []>} : vector<8x32xbf16>, vector<32x128xbf16>, vector<8x128xf32> -> vector<8x128xf32>
    %250 = arith.addf %247, %249 : vector<8x128xf32>
    %251 = arith.negf %250 : vector<8x128xf32>
    %252 = math.exp %251 : vector<8x128xf32>
    %cst_100 = arith.constant 1.000000e+00 : f32
    %253 = vector.broadcast %cst_100 : f32 to vector<8x128xf32>
    %254 = arith.addf %253, %252 : vector<8x128xf32>
    %255 = arith.divf %253, %254 : vector<8x128xf32>
    %256 = math.tanh %250 : vector<8x128xf32>
    %257 = arith.select %5, %256, %255 : vector<8x128xi1>, vector<8x128xf32>
    %258 = vector.extract_strided_slice %257 {offsets = [0, 0], sizes = [8, 32], strides = [1, 1]} : vector<8x128xf32> to vector<8x32xf32>
    %259 = vector.extract_strided_slice %257 {offsets = [0, 32], sizes = [8, 32], strides = [1, 1]} : vector<8x128xf32> to vector<8x32xf32>
    %260 = vector.extract_strided_slice %257 {offsets = [0, 64], sizes = [8, 32], strides = [1, 1]} : vector<8x128xf32> to vector<8x32xf32>
    %261 = vector.extract_strided_slice %257 {offsets = [0, 96], sizes = [8, 32], strides = [1, 1]} : vector<8x128xf32> to vector<8x32xf32>
    %262 = arith.mulf %259, %246 : vector<8x32xf32>
    %263 = arith.mulf %258, %260 : vector<8x32xf32>
    %264 = arith.addf %262, %263 : vector<8x32xf32>
    %265 = math.tanh %264 : vector<8x32xf32>
    %266 = arith.mulf %261, %265 : vector<8x32xf32>
    %c0_101 = arith.constant 0 : index
    %c0_102 = arith.constant 0 : index
    %267 = vector.load %arg18[%c0_101, %c0_102] : memref<72x32xf32, #tpu.memory_space<vmem>>, vector<8x32xf32>
    tpu.vector_store %arg18[%c0_101, %c0_102], %266 {strides = array<i32>} : memref<72x32xf32, #tpu.memory_space<vmem>>, vector<8x32xf32>,
    %c8_103 = arith.constant 8 : index
    %c0_104 = arith.constant 0 : index
    %268 = vector.load %arg17[%c8_103, %c0_104] : memref<72x128xf32, #tpu.memory_space<vmem>>, vector<8x128xf32>
    %269 = arith.truncf %266 : vector<8x32xf32> to vector<8x32xbf16>
    %cst_105 = arith.constant dense<0.000000e+00> : vector<8x128xf32>
    %270 = tpu.matmul %269, %208, %cst_105 {dimension_numbers = #tpu.dot_dimension_numbers<[1], [0], [0], [1], [0, 0, 1, 1], [], []>} : vector<8x32xbf16>, vector<32x128xbf16>, vector<8x128xf32> -> vector<8x128xf32>
    %271 = arith.addf %268, %270 : vector<8x128xf32>
    %272 = arith.negf %271 : vector<8x128xf32>
    %273 = math.exp %272 : vector<8x128xf32>
    %cst_106 = arith.constant 1.000000e+00 : f32
    %274 = vector.broadcast %cst_106 : f32 to vector<8x128xf32>
    %275 = arith.addf %274, %273 : vector<8x128xf32>
    %276 = arith.divf %274, %275 : vector<8x128xf32>
    %277 = math.tanh %271 : vector<8x128xf32>
    %278 = arith.select %5, %277, %276 : vector<8x128xi1>, vector<8x128xf32>
    %279 = vector.extract_strided_slice %278 {offsets = [0, 0], sizes = [8, 32], strides = [1, 1]} : vector<8x128xf32> to vector<8x32xf32>
    %280 = vector.extract_strided_slice %278 {offsets = [0, 32], sizes = [8, 32], strides = [1, 1]} : vector<8x128xf32> to vector<8x32xf32>
    %281 = vector.extract_strided_slice %278 {offsets = [0, 64], sizes = [8, 32], strides = [1, 1]} : vector<8x128xf32> to vector<8x32xf32>
    %282 = vector.extract_strided_slice %278 {offsets = [0, 96], sizes = [8, 32], strides = [1, 1]} : vector<8x128xf32> to vector<8x32xf32>
    %283 = arith.mulf %280, %264 : vector<8x32xf32>
    %284 = arith.mulf %279, %281 : vector<8x32xf32>
    %285 = arith.addf %283, %284 : vector<8x32xf32>
    %286 = math.tanh %285 : vector<8x32xf32>
    %287 = arith.mulf %282, %286 : vector<8x32xf32>
    %c8_107 = arith.constant 8 : index
    %c0_108 = arith.constant 0 : index
    %288 = vector.load %arg18[%c8_107, %c0_108] : memref<72x32xf32, #tpu.memory_space<vmem>>, vector<8x32xf32>
    tpu.vector_store %arg18[%c8_107, %c0_108], %287 {strides = array<i32>} : memref<72x32xf32, #tpu.memory_space<vmem>>, vector<8x32xf32>,
    %c16_109 = arith.constant 16 : index
    %c0_110 = arith.constant 0 : index
    %289 = vector.load %arg17[%c16_109, %c0_110] : memref<72x128xf32, #tpu.memory_space<vmem>>, vector<8x128xf32>
    %290 = arith.truncf %287 : vector<8x32xf32> to vector<8x32xbf16>
    %cst_111 = arith.constant dense<0.000000e+00> : vector<8x128xf32>
    %291 = tpu.matmul %290, %208, %cst_111 {dimension_numbers = #tpu.dot_dimension_numbers<[1], [0], [0], [1], [0, 0, 1, 1], [], []>} : vector<8x32xbf16>, vector<32x128xbf16>, vector<8x128xf32> -> vector<8x128xf32>
    %292 = arith.addf %289, %291 : vector<8x128xf32>
    %293 = arith.negf %292 : vector<8x128xf32>
    %294 = math.exp %293 : vector<8x128xf32>
    %cst_112 = arith.constant 1.000000e+00 : f32
    %295 = vector.broadcast %cst_112 : f32 to vector<8x128xf32>
    %296 = arith.addf %295, %294 : vector<8x128xf32>
    %297 = arith.divf %295, %296 : vector<8x128xf32>
    %298 = math.tanh %292 : vector<8x128xf32>
    %299 = arith.select %5, %298, %297 : vector<8x128xi1>, vector<8x128xf32>
    %300 = vector.extract_strided_slice %299 {offsets = [0, 0], sizes = [8, 32], strides = [1, 1]} : vector<8x128xf32> to vector<8x32xf32>
    %301 = vector.extract_strided_slice %299 {offsets = [0, 32], sizes = [8, 32], strides = [1, 1]} : vector<8x128xf32> to vector<8x32xf32>
    %302 = vector.extract_strided_slice %299 {offsets = [0, 64], sizes = [8, 32], strides = [1, 1]} : vector<8x128xf32> to vector<8x32xf32>
    %303 = vector.extract_strided_slice %299 {offsets = [0, 96], sizes = [8, 32], strides = [1, 1]} : vector<8x128xf32> to vector<8x32xf32>
    %304 = arith.mulf %301, %285 : vector<8x32xf32>
    %305 = arith.mulf %300, %302 : vector<8x32xf32>
    %306 = arith.addf %304, %305 : vector<8x32xf32>
    %307 = math.tanh %306 : vector<8x32xf32>
    %308 = arith.mulf %303, %307 : vector<8x32xf32>
    %c16_113 = arith.constant 16 : index
    %c0_114 = arith.constant 0 : index
    %309 = vector.load %arg18[%c16_113, %c0_114] : memref<72x32xf32, #tpu.memory_space<vmem>>, vector<8x32xf32>
    tpu.vector_store %arg18[%c16_113, %c0_114], %308 {strides = array<i32>} : memref<72x32xf32, #tpu.memory_space<vmem>>, vector<8x32xf32>,
    %c24_115 = arith.constant 24 : index
    %c0_116 = arith.constant 0 : index
    %310 = vector.load %arg17[%c24_115, %c0_116] : memref<72x128xf32, #tpu.memory_space<vmem>>, vector<8x128xf32>
    %311 = arith.truncf %308 : vector<8x32xf32> to vector<8x32xbf16>
    %cst_117 = arith.constant dense<0.000000e+00> : vector<8x128xf32>
    %312 = tpu.matmul %311, %208, %cst_117 {dimension_numbers = #tpu.dot_dimension_numbers<[1], [0], [0], [1], [0, 0, 1, 1], [], []>} : vector<8x32xbf16>, vector<32x128xbf16>, vector<8x128xf32> -> vector<8x128xf32>
    %313 = arith.addf %310, %312 : vector<8x128xf32>
    %314 = arith.negf %313 : vector<8x128xf32>
    %315 = math.exp %314 : vector<8x128xf32>
    %cst_118 = arith.constant 1.000000e+00 : f32
    %316 = vector.broadcast %cst_118 : f32 to vector<8x128xf32>
    %317 = arith.addf %316, %315 : vector<8x128xf32>
    %318 = arith.divf %316, %317 : vector<8x128xf32>
    %319 = math.tanh %313 : vector<8x128xf32>
    %320 = arith.select %5, %319, %318 : vector<8x128xi1>, vector<8x128xf32>
    %321 = vector.extract_strided_slice %320 {offsets = [0, 0], sizes = [8, 32], strides = [1, 1]} : vector<8x128xf32> to vector<8x32xf32>
    %322 = vector.extract_strided_slice %320 {offsets = [0, 32], sizes = [8, 32], strides = [1, 1]} : vector<8x128xf32> to vector<8x32xf32>
    %323 = vector.extract_strided_slice %320 {offsets = [0, 64], sizes = [8, 32], strides = [1, 1]} : vector<8x128xf32> to vector<8x32xf32>
    %324 = vector.extract_strided_slice %320 {offsets = [0, 96], sizes = [8, 32], strides = [1, 1]} : vector<8x128xf32> to vector<8x32xf32>
    %325 = arith.mulf %322, %306 : vector<8x32xf32>
    %326 = arith.mulf %321, %323 : vector<8x32xf32>
    %327 = arith.addf %325, %326 : vector<8x32xf32>
    %328 = math.tanh %327 : vector<8x32xf32>
    %329 = arith.mulf %324, %328 : vector<8x32xf32>
    %c24_119 = arith.constant 24 : index
    %c0_120 = arith.constant 0 : index
    %330 = vector.load %arg18[%c24_119, %c0_120] : memref<72x32xf32, #tpu.memory_space<vmem>>, vector<8x32xf32>
    tpu.vector_store %arg18[%c24_119, %c0_120], %329 {strides = array<i32>} : memref<72x32xf32, #tpu.memory_space<vmem>>, vector<8x32xf32>,
    %c32_121 = arith.constant 32 : index
    %c0_122 = arith.constant 0 : index
    %331 = vector.load %arg17[%c32_121, %c0_122] : memref<72x128xf32, #tpu.memory_space<vmem>>, vector<8x128xf32>
    %332 = arith.truncf %329 : vector<8x32xf32> to vector<8x32xbf16>
    %cst_123 = arith.constant dense<0.000000e+00> : vector<8x128xf32>
    %333 = tpu.matmul %332, %208, %cst_123 {dimension_numbers = #tpu.dot_dimension_numbers<[1], [0], [0], [1], [0, 0, 1, 1], [], []>} : vector<8x32xbf16>, vector<32x128xbf16>, vector<8x128xf32> -> vector<8x128xf32>
    %334 = arith.addf %331, %333 : vector<8x128xf32>
    %335 = arith.negf %334 : vector<8x128xf32>
    %336 = math.exp %335 : vector<8x128xf32>
    %cst_124 = arith.constant 1.000000e+00 : f32
    %337 = vector.broadcast %cst_124 : f32 to vector<8x128xf32>
    %338 = arith.addf %337, %336 : vector<8x128xf32>
    %339 = arith.divf %337, %338 : vector<8x128xf32>
    %340 = math.tanh %334 : vector<8x128xf32>
    %341 = arith.select %5, %340, %339 : vector<8x128xi1>, vector<8x128xf32>
    %342 = vector.extract_strided_slice %341 {offsets = [0, 0], sizes = [8, 32], strides = [1, 1]} : vector<8x128xf32> to vector<8x32xf32>
    %343 = vector.extract_strided_slice %341 {offsets = [0, 32], sizes = [8, 32], strides = [1, 1]} : vector<8x128xf32> to vector<8x32xf32>
    %344 = vector.extract_strided_slice %341 {offsets = [0, 64], sizes = [8, 32], strides = [1, 1]} : vector<8x128xf32> to vector<8x32xf32>
    %345 = vector.extract_strided_slice %341 {offsets = [0, 96], sizes = [8, 32], strides = [1, 1]} : vector<8x128xf32> to vector<8x32xf32>
    %346 = arith.mulf %343, %327 : vector<8x32xf32>
    %347 = arith.mulf %342, %344 : vector<8x32xf32>
    %348 = arith.addf %346, %347 : vector<8x32xf32>
    %349 = math.tanh %348 : vector<8x32xf32>
    %350 = arith.mulf %345, %349 : vector<8x32xf32>
    %c32_125 = arith.constant 32 : index
    %c0_126 = arith.constant 0 : index
    %351 = vector.load %arg18[%c32_125, %c0_126] : memref<72x32xf32, #tpu.memory_space<vmem>>, vector<8x32xf32>
    tpu.vector_store %arg18[%c32_125, %c0_126], %350 {strides = array<i32>} : memref<72x32xf32, #tpu.memory_space<vmem>>, vector<8x32xf32>,
    %c40_127 = arith.constant 40 : index
    %c0_128 = arith.constant 0 : index
    %352 = vector.load %arg17[%c40_127, %c0_128] : memref<72x128xf32, #tpu.memory_space<vmem>>, vector<8x128xf32>
    %353 = arith.truncf %350 : vector<8x32xf32> to vector<8x32xbf16>
    %cst_129 = arith.constant dense<0.000000e+00> : vector<8x128xf32>
    %354 = tpu.matmul %353, %208, %cst_129 {dimension_numbers = #tpu.dot_dimension_numbers<[1], [0], [0], [1], [0, 0, 1, 1], [], []>} : vector<8x32xbf16>, vector<32x128xbf16>, vector<8x128xf32> -> vector<8x128xf32>
    %355 = arith.addf %352, %354 : vector<8x128xf32>
    %356 = arith.negf %355 : vector<8x128xf32>
    %357 = math.exp %356 : vector<8x128xf32>
    %cst_130 = arith.constant 1.000000e+00 : f32
    %358 = vector.broadcast %cst_130 : f32 to vector<8x128xf32>
    %359 = arith.addf %358, %357 : vector<8x128xf32>
    %360 = arith.divf %358, %359 : vector<8x128xf32>
    %361 = math.tanh %355 : vector<8x128xf32>
    %362 = arith.select %5, %361, %360 : vector<8x128xi1>, vector<8x128xf32>
    %363 = vector.extract_strided_slice %362 {offsets = [0, 0], sizes = [8, 32], strides = [1, 1]} : vector<8x128xf32> to vector<8x32xf32>
    %364 = vector.extract_strided_slice %362 {offsets = [0, 32], sizes = [8, 32], strides = [1, 1]} : vector<8x128xf32> to vector<8x32xf32>
    %365 = vector.extract_strided_slice %362 {offsets = [0, 64], sizes = [8, 32], strides = [1, 1]} : vector<8x128xf32> to vector<8x32xf32>
    %366 = vector.extract_strided_slice %362 {offsets = [0, 96], sizes = [8, 32], strides = [1, 1]} : vector<8x128xf32> to vector<8x32xf32>
    %367 = arith.mulf %364, %348 : vector<8x32xf32>
    %368 = arith.mulf %363, %365 : vector<8x32xf32>
    %369 = arith.addf %367, %368 : vector<8x32xf32>
    %370 = math.tanh %369 : vector<8x32xf32>
    %371 = arith.mulf %366, %370 : vector<8x32xf32>
    %c40_131 = arith.constant 40 : index
    %c0_132 = arith.constant 0 : index
    %372 = vector.load %arg18[%c40_131, %c0_132] : memref<72x32xf32, #tpu.memory_space<vmem>>, vector<8x32xf32>
    tpu.vector_store %arg18[%c40_131, %c0_132], %371 {strides = array<i32>} : memref<72x32xf32, #tpu.memory_space<vmem>>, vector<8x32xf32>,
    %c48_133 = arith.constant 48 : index
    %c0_134 = arith.constant 0 : index
    %373 = vector.load %arg17[%c48_133, %c0_134] : memref<72x128xf32, #tpu.memory_space<vmem>>, vector<8x128xf32>
    %374 = arith.truncf %371 : vector<8x32xf32> to vector<8x32xbf16>
    %cst_135 = arith.constant dense<0.000000e+00> : vector<8x128xf32>
    %375 = tpu.matmul %374, %208, %cst_135 {dimension_numbers = #tpu.dot_dimension_numbers<[1], [0], [0], [1], [0, 0, 1, 1], [], []>} : vector<8x32xbf16>, vector<32x128xbf16>, vector<8x128xf32> -> vector<8x128xf32>
    %376 = arith.addf %373, %375 : vector<8x128xf32>
    %377 = arith.negf %376 : vector<8x128xf32>
    %378 = math.exp %377 : vector<8x128xf32>
    %cst_136 = arith.constant 1.000000e+00 : f32
    %379 = vector.broadcast %cst_136 : f32 to vector<8x128xf32>
    %380 = arith.addf %379, %378 : vector<8x128xf32>
    %381 = arith.divf %379, %380 : vector<8x128xf32>
    %382 = math.tanh %376 : vector<8x128xf32>
    %383 = arith.select %5, %382, %381 : vector<8x128xi1>, vector<8x128xf32>
    %384 = vector.extract_strided_slice %383 {offsets = [0, 0], sizes = [8, 32], strides = [1, 1]} : vector<8x128xf32> to vector<8x32xf32>
    %385 = vector.extract_strided_slice %383 {offsets = [0, 32], sizes = [8, 32], strides = [1, 1]} : vector<8x128xf32> to vector<8x32xf32>
    %386 = vector.extract_strided_slice %383 {offsets = [0, 64], sizes = [8, 32], strides = [1, 1]} : vector<8x128xf32> to vector<8x32xf32>
    %387 = vector.extract_strided_slice %383 {offsets = [0, 96], sizes = [8, 32], strides = [1, 1]} : vector<8x128xf32> to vector<8x32xf32>
    %388 = arith.mulf %385, %369 : vector<8x32xf32>
    %389 = arith.mulf %384, %386 : vector<8x32xf32>
    %390 = arith.addf %388, %389 : vector<8x32xf32>
    %391 = math.tanh %390 : vector<8x32xf32>
    %392 = arith.mulf %387, %391 : vector<8x32xf32>
    %c48_137 = arith.constant 48 : index
    %c0_138 = arith.constant 0 : index
    %393 = vector.load %arg18[%c48_137, %c0_138] : memref<72x32xf32, #tpu.memory_space<vmem>>, vector<8x32xf32>
    tpu.vector_store %arg18[%c48_137, %c0_138], %392 {strides = array<i32>} : memref<72x32xf32, #tpu.memory_space<vmem>>, vector<8x32xf32>,
    %c56_139 = arith.constant 56 : index
    %c0_140 = arith.constant 0 : index
    %394 = vector.load %arg17[%c56_139, %c0_140] : memref<72x128xf32, #tpu.memory_space<vmem>>, vector<8x128xf32>
    %395 = arith.truncf %392 : vector<8x32xf32> to vector<8x32xbf16>
    %cst_141 = arith.constant dense<0.000000e+00> : vector<8x128xf32>
    %396 = tpu.matmul %395, %208, %cst_141 {dimension_numbers = #tpu.dot_dimension_numbers<[1], [0], [0], [1], [0, 0, 1, 1], [], []>} : vector<8x32xbf16>, vector<32x128xbf16>, vector<8x128xf32> -> vector<8x128xf32>
    %397 = arith.addf %394, %396 : vector<8x128xf32>
    %398 = arith.negf %397 : vector<8x128xf32>
    %399 = math.exp %398 : vector<8x128xf32>
    %cst_142 = arith.constant 1.000000e+00 : f32
    %400 = vector.broadcast %cst_142 : f32 to vector<8x128xf32>
    %401 = arith.addf %400, %399 : vector<8x128xf32>
    %402 = arith.divf %400, %401 : vector<8x128xf32>
    %403 = math.tanh %397 : vector<8x128xf32>
    %404 = arith.select %5, %403, %402 : vector<8x128xi1>, vector<8x128xf32>
    %405 = vector.extract_strided_slice %404 {offsets = [0, 0], sizes = [8, 32], strides = [1, 1]} : vector<8x128xf32> to vector<8x32xf32>
    %406 = vector.extract_strided_slice %404 {offsets = [0, 32], sizes = [8, 32], strides = [1, 1]} : vector<8x128xf32> to vector<8x32xf32>
    %407 = vector.extract_strided_slice %404 {offsets = [0, 64], sizes = [8, 32], strides = [1, 1]} : vector<8x128xf32> to vector<8x32xf32>
    %408 = vector.extract_strided_slice %404 {offsets = [0, 96], sizes = [8, 32], strides = [1, 1]} : vector<8x128xf32> to vector<8x32xf32>
    %409 = arith.mulf %406, %390 : vector<8x32xf32>
    %410 = arith.mulf %405, %407 : vector<8x32xf32>
    %411 = arith.addf %409, %410 : vector<8x32xf32>
    %412 = math.tanh %411 : vector<8x32xf32>
    %413 = arith.mulf %408, %412 : vector<8x32xf32>
    %c56_143 = arith.constant 56 : index
    %c0_144 = arith.constant 0 : index
    %414 = vector.load %arg18[%c56_143, %c0_144] : memref<72x32xf32, #tpu.memory_space<vmem>>, vector<8x32xf32>
    tpu.vector_store %arg18[%c56_143, %c0_144], %413 {strides = array<i32>} : memref<72x32xf32, #tpu.memory_space<vmem>>, vector<8x32xf32>,
    %c64_145 = arith.constant 64 : index
    %c0_146 = arith.constant 0 : index
    %415 = vector.load %arg17[%c64_145, %c0_146] : memref<72x128xf32, #tpu.memory_space<vmem>>, vector<8x128xf32>
    %416 = arith.truncf %413 : vector<8x32xf32> to vector<8x32xbf16>
    %cst_147 = arith.constant dense<0.000000e+00> : vector<8x128xf32>
    %417 = tpu.matmul %416, %208, %cst_147 {dimension_numbers = #tpu.dot_dimension_numbers<[1], [0], [0], [1], [0, 0, 1, 1], [], []>} : vector<8x32xbf16>, vector<32x128xbf16>, vector<8x128xf32> -> vector<8x128xf32>
    %418 = arith.addf %415, %417 : vector<8x128xf32>
    %419 = arith.negf %418 : vector<8x128xf32>
    %420 = math.exp %419 : vector<8x128xf32>
    %cst_148 = arith.constant 1.000000e+00 : f32
    %421 = vector.broadcast %cst_148 : f32 to vector<8x128xf32>
    %422 = arith.addf %421, %420 : vector<8x128xf32>
    %423 = arith.divf %421, %422 : vector<8x128xf32>
    %424 = math.tanh %418 : vector<8x128xf32>
    %425 = arith.select %5, %424, %423 : vector<8x128xi1>, vector<8x128xf32>
    %426 = vector.extract_strided_slice %425 {offsets = [0, 0], sizes = [8, 32], strides = [1, 1]} : vector<8x128xf32> to vector<8x32xf32>
    %427 = vector.extract_strided_slice %425 {offsets = [0, 32], sizes = [8, 32], strides = [1, 1]} : vector<8x128xf32> to vector<8x32xf32>
    %428 = vector.extract_strided_slice %425 {offsets = [0, 64], sizes = [8, 32], strides = [1, 1]} : vector<8x128xf32> to vector<8x32xf32>
    %429 = vector.extract_strided_slice %425 {offsets = [0, 96], sizes = [8, 32], strides = [1, 1]} : vector<8x128xf32> to vector<8x32xf32>
    %430 = arith.mulf %427, %411 : vector<8x32xf32>
    %431 = arith.mulf %426, %428 : vector<8x32xf32>
    %432 = arith.addf %430, %431 : vector<8x32xf32>
    %433 = math.tanh %432 : vector<8x32xf32>
    %434 = arith.mulf %429, %433 : vector<8x32xf32>
    %c64_149 = arith.constant 64 : index
    %c0_150 = arith.constant 0 : index
    %435 = vector.load %arg18[%c64_149, %c0_150] : memref<72x32xf32, #tpu.memory_space<vmem>>, vector<8x32xf32>
    tpu.vector_store %arg18[%c64_149, %c0_150], %434 {strides = array<i32>} : memref<72x32xf32, #tpu.memory_space<vmem>>, vector<8x32xf32>,
    %c0_151 = arith.constant 0 : index
    %c0_152 = arith.constant 0 : index
    %436 = vector.load %arg18[%c0_151, %c0_152] : memref<72x32xf32, #tpu.memory_space<vmem>>, vector<72x32xf32>
    %437 = arith.truncf %436 : vector<72x32xf32> to vector<72x32xbf16>
    %c0_153 = arith.constant 0 : index
    %c0_154 = arith.constant 0 : index
    %438 = vector.load %arg12[%c0_153, %c0_154] : memref<32x128xbf16, #tpu.memory_space<vmem>>, vector<32x128xbf16>
    %cst_155 = arith.constant dense<0.000000e+00> : vector<72x128xf32>
    %439 = tpu.matmul %437, %438, %cst_155 {dimension_numbers = #tpu.dot_dimension_numbers<[1], [0], [0], [1], [0, 0, 1, 1], [], []>} : vector<72x32xbf16>, vector<32x128xbf16>, vector<72x128xf32> -> vector<72x128xf32>
    %c0_156 = arith.constant 0 : index
    %c0_157 = arith.constant 0 : index
    %440 = vector.load %arg13[%c0_156, %c0_157] : memref<1x128xf32, #tpu.memory_space<vmem>>, vector<1x128xf32>
    %441 = vector.broadcast %440 : vector<1x128xf32> to vector<72x128xf32>
    %442 = arith.addf %439, %441 : vector<72x128xf32>
    %c0_158 = arith.constant 0 : index
    %c0_159 = arith.constant 0 : index
    %443 = vector.load %arg14[%c0_158, %c0_159] : memref<72x128xf32, #tpu.memory_space<vmem>>, vector<72x128xf32>
    tpu.vector_store %arg14[%c0_158, %c0_159], %442 {strides = array<i32>} : memref<72x128xf32, #tpu.memory_space<vmem>>, vector<72x128xf32>,
    %444 = vector.shape_cast %207 : vector<1x1xf32> to vector<1x1xf32>
    %445 = vector.broadcast %444 : vector<1x1xf32> to vector<8x64xf32>
    %446 = tpu.concatenate %434, %432, %445 in 1 : vector<8x32xf32>, vector<8x32xf32>, vector<8x64xf32> -> vector<8x128xf32>
    %c0_160 = arith.constant 0 : index
    %c0_161 = arith.constant 0 : index
    %447 = vector.load %arg15[%c0_160, %c0_161] : memref<8x128xf32, #tpu.memory_space<vmem>>, vector<8x128xf32>
    tpu.vector_store %arg15[%c0_160, %c0_161], %446 {strides = array<i32>} : memref<8x128xf32, #tpu.memory_space<vmem>>, vector<8x128xf32>,
    return
  }
}

</mosaic_0001>

<llo_original>
// kernel: rvae_forward.3
$region0: #{rvae_forward.3}
  #allocation0 [shape = 'u32[]', space=smem, size = 0x4, offset = 0x4, fixed_abs, tag = 'smem constant byte address 0x4 - core index']
  #allocation1 [shape = 'u32[72,128]{1,0:T(1,128)}', space=vmem, size = 0x9000, scoped, tag = 'internal scratch']
  #allocation2 [shape = 'f32[64,128]{1,0:T(8,128)}', space=vmem, size = 0x8000, scoped, tag = 'scratch operand']
  #allocation3 [shape = 'f32[72,128]{1,0:T(8,128)}', space=vmem, size = 0x9000, scoped, tag = 'scratch operand']
  #allocation4 [shape = 'f32[72,32]{1,0:T(8,128)}', space=vmem, size = 0x9000, scoped, tag = 'scratch operand']
  %s0 = inlined_call_operand.vmem [shape: bf16[64,24], index: 0, kind: input, shape index: {}]
  %s1 = inlined_call_operand.vmem [shape: bf16[24,128], index: 1, kind: input, shape index: {}]
  %s2 = inlined_call_operand.vmem [shape: bf16[32,128], index: 2, kind: input, shape index: {}]
  %s3 = inlined_call_operand.vmem [shape: f32[1,128], index: 3, kind: input, shape index: {}]
  %s4 = inlined_call_operand.vmem [shape: f32[32,32], index: 4, kind: input, shape index: {}]
  %s5 = inlined_call_operand.vmem [shape: f32[1,32], index: 5, kind: input, shape index: {}]
  %s6 = inlined_call_operand.vmem [shape: f32[8,16], index: 6, kind: input, shape index: {}]
  %s7 = inlined_call_operand.vmem [shape: bf16[72,16], index: 7, kind: input, shape index: {}]
  %s8 = inlined_call_operand.vmem [shape: bf16[16,128], index: 8, kind: input, shape index: {}]
  %s9 = inlined_call_operand.vmem [shape: bf16[16,128], index: 9, kind: input, shape index: {}]
  %s10 = inlined_call_operand.vmem [shape: bf16[32,128], index: 10, kind: input, shape index: {}]
  %s11 = inlined_call_operand.vmem [shape: f32[1,128], index: 11, kind: input, shape index: {}]
  %s12 = inlined_call_operand.vmem [shape: bf16[32,128], index: 12, kind: input, shape index: {}]
  %s13 = inlined_call_operand.vmem [shape: f32[1,128], index: 13, kind: input, shape index: {}]
  %s14 = inlined_call_operand.vmem [shape: f32[72,128], index: 14, kind: output, shape index: {0}]
  %s15 = inlined_call_operand.vmem [shape: f32[8,128], index: 15, kind: output, shape index: {1}]
  %16 = xla_tuple %s14, %s15
  %s17 = sld [smem:[#allocation0]]
  $region74: #{rvae_forward.3} parent=0
    _
  %s19 = ssub.s32 1, %s17
  %s20 = scalar_select 0, %s19, %s17
  // Predicated region
  $region2: #{rvae_forward.3} parent=0 // pred_check
    _
  $region3: #{rvae_forward.3} parent=0 // pred_check_branch
    %22 = sbr.rel (0) target = $region5
  $region4: #{rvae_forward.3} parent=0 // pred_region
    _
  $region5: #{rvae_forward.3} parent=0 // pred_fallthru
    _
  // Predicated region
  $region6: #{rvae_forward.3} parent=0 // pred_check
    _
  $region7: #{rvae_forward.3} parent=0 // pred_check_branch
    %24 = sbr.rel (0) target = $region9
  $region8: #{rvae_forward.3} parent=0 // pred_region
    _
  $region9: #{rvae_forward.3} parent=0 // pred_fallthru
    _
  // Predicated region
  $region10: #{rvae_forward.3} parent=0 // pred_check
    _
  $region11: #{rvae_forward.3} parent=0 // pred_check_branch
    %26 = sbr.rel (0) target = $region13
  $region12: #{rvae_forward.3} parent=0 // pred_region
    _
  $region13: #{rvae_forward.3} parent=0 // pred_fallthru
    _
  // Predicated region
  $region14: #{rvae_forward.3} parent=0 // pred_check
    _
  $region15: #{rvae_forward.3} parent=0 // pred_check_branch
    %28 = sbr.rel (0) target = $region17
  $region16: #{rvae_forward.3} parent=0 // pred_region
    _
  $region17: #{rvae_forward.3} parent=0 // pred_fallthru
    _
  // Predicated region
  $region18: #{rvae_forward.3} parent=0 // pred_check
    _
  $region19: #{rvae_forward.3} parent=0 // pred_check_branch
    %30 = sbr.rel (0) target = $region21
  $region20: #{rvae_forward.3} parent=0 // pred_region
    _
  $region21: #{rvae_forward.3} parent=0 // pred_fallthru
    _
  // Predicated region
  $region22: #{rvae_forward.3} parent=0 // pred_check
    _
  $region23: #{rvae_forward.3} parent=0 // pred_check_branch
    %32 = sbr.rel (0) target = $region25
  $region24: #{rvae_forward.3} parent=0 // pred_region
    _
  $region25: #{rvae_forward.3} parent=0 // pred_fallthru
    _
  // Predicated region
  $region26: #{rvae_forward.3} parent=0 // pred_check
    _
  $region27: #{rvae_forward.3} parent=0 // pred_check_branch
    %34 = sbr.rel (0) target = $region29
  $region28: #{rvae_forward.3} parent=0 // pred_region
    _
  $region29: #{rvae_forward.3} parent=0 // pred_fallthru
    _
  // Predicated region
  $region30: #{rvae_forward.3} parent=0 // pred_check
    _
  $region31: #{rvae_forward.3} parent=0 // pred_check_branch
    %36 = sbr.rel (0) target = $region33
  $region32: #{rvae_forward.3} parent=0 // pred_region
    _
  $region33: #{rvae_forward.3} parent=0 // pred_fallthru
    _
  // Predicated region
  $region34: #{rvae_forward.3} parent=0 // pred_check
    _
  $region35: #{rvae_forward.3} parent=0 // pred_check_branch
    %38 = sbr.rel (0) target = $region37
  $region36: #{rvae_forward.3} parent=0 // pred_region
    _
  $region37: #{rvae_forward.3} parent=0 // pred_fallthru
    _
  // Predicated region
  $region38: #{rvae_forward.3} parent=0 // pred_check
    _
  $region39: #{rvae_forward.3} parent=0 // pred_check_branch
    %40 = sbr.rel (0) target = $region41
  $region40: #{rvae_forward.3} parent=0 // pred_region
    _
  $region41: #{rvae_forward.3} parent=0 // pred_fallthru
    _
  // Predicated region
  $region42: #{rvae_forward.3} parent=0 // pred_check
    _
  $region43: #{rvae_forward.3} parent=0 // pred_check_branch
    %42 = sbr.rel (0) target = $region45
  $region44: #{rvae_forward.3} parent=0 // pred_region
    _
  $region45: #{rvae_forward.3} parent=0 // pred_fallthru
    _
  // Predicated region
  $region46: #{rvae_forward.3} parent=0 // pred_check
    _
  $region47: #{rvae_forward.3} parent=0 // pred_check_branch
    %44 = sbr.rel (0) target = $region49
  $region48: #{rvae_forward.3} parent=0 // pred_region
    _
  $region49: #{rvae_forward.3} parent=0 // pred_fallthru
    _
  // Predicated region
  $region50: #{rvae_forward.3} parent=0 // pred_check
    _
  $region51: #{rvae_forward.3} parent=0 // pred_check_branch
    %46 = sbr.rel (0) target = $region53
  $region52: #{rvae_forward.3} parent=0 // pred_region
    _
  $region53: #{rvae_forward.3} parent=0 // pred_fallthru
    _
  // Predicated region
  $region54: #{rvae_forward.3} parent=0 // pred_check
    _
  $region55: #{rvae_forward.3} parent=0 // pred_check_branch
    %48 = sbr.rel (0) target = $region57
  $region56: #{rvae_forward.3} parent=0 // pred_region
    _
  $region57: #{rvae_forward.3} parent=0 // pred_fallthru
    _
  %v50 = vlaneseq
  %v51 = vand.u32 %v50, 127
  %vm52 = vcmp.ge.s32.totalorder %v51, 64
  %vm53 = vcmp.lt.s32.totalorder %v51, 96
  %vm54 = vmand %vm52, %vm53
  %v55 = vld [vmem:[%s0] sm:$0xf]
  %v56 = vld [vmem:[%s0 + $0x4] sm:$0xf]
  %v57 = vld [vmem:[%s0 + $0x8] sm:$0xf]
  %v58 = vld [vmem:[%s0 + $0xc] sm:$0xf]
  %v59 = vld [vmem:[%s0 + $0x10] sm:$0xf]
  %v60 = vld [vmem:[%s0 + $0x14] sm:$0xf]
  %v61 = vld [vmem:[%s0 + $0x18] sm:$0xf]
  %v62 = vld [vmem:[%s0 + $0x1c] sm:$0xf]
  %v63 = vld [vmem:[%s1] sm:$0xf]
  %v64 = vld [vmem:[%s1 + $0x4] sm:$0xf]
  %v65 = vld [vmem:[%s1 + $0x8] sm:$0xf]
  %v66 = vld [vmem:[%s3] sm:$0x1]
  %v68 = vperm.slane %v66, 0
  %v78 = vunpack.c.l.b16 %v55
  %v79 = vunpack.c.l.b16 %v56
  %v80 = vunpack.c.l.b16 %v57
  %v81 = vunpack.c.l.b16 %v58
  %v82 = vunpack.c.l.b16 %v59
  %v83 = vunpack.c.l.b16 %v60
  %v84 = vunpack.c.l.b16 %v61
  %v85 = vunpack.c.l.b16 %v62
  %v86 = vpack.c.b16 %v79, %v78
  %v87 = vpack.c.b16 %v81, %v80
  %v88 = vpack.c.b16 %v83, %v82
  %v89 = vpack.c.b16 %v85, %v84
  %v93 = vunpack.c.l.b16 %v63
  %v94 = vunpack.c.l.b16 %v64
  %v95 = vunpack.c.l.b16 %v65
  %v96 = vpack.c.b16 %v94, %v93
  %v97 = vpack.c.b16 %v95, %v95
  %vm99 = vcmask 195584
  %v101 = vsel %vm99, %v86, 0
  %v104 = vsel %vm99, %v87, 0
  %v107 = vsel %vm99, %v88, 0
  %v110 = vsel %vm99, %v89, 0
  %vm112 = vcmask 1043456
  %v114 = vsel %vm112, %v97, 0
  %116 = vmatpush.bf16.msra.mxu0 0
  %117 = vmatpush.bf16.msra.mxu0 0
  %118 = vmatpush.bf16.msra.mxu0 0
  %119 = vmatpush.bf16.msra.mxu0 0
  %120 = vmatpush.bf16.msra.mxu0 0
  %121 = vmatpush.bf16.msra.mxu0 0
  %122 = vmatpush.bf16.msra.mxu0 %v114
  %123 = vmatpush.bf16.msra.mxu0 %v96
  %124 = vmatmul.bf16.gmra.mxu0 %v101
  %v125 = vpop.f32.mrf.mxu0
  %v126 = vadd.f32 %v68, %v125
  %v127 = vpop.f32.mrf.mxu0
  %v128 = vadd.f32 %v68, %v127
  %129 = vmatmul.bf16.gmra.mxu0 %v104
  %v130 = vpop.f32.mrf.mxu0
  %v131 = vadd.f32 %v68, %v130
  %v132 = vpop.f32.mrf.mxu0
  %v133 = vadd.f32 %v68, %v132
  %134 = vmatmul.bf16.gmra.mxu0 %v107
  %v135 = vpop.f32.mrf.mxu0
  %v136 = vadd.f32 %v68, %v135
  %v137 = vpop.f32.mrf.mxu0
  %v138 = vadd.f32 %v68, %v137
  %139 = vmatmul.bf16.gmra.mxu0 %v110
  %v140 = vpop.f32.mrf.mxu0
  %v141 = vadd.f32 %v68, %v140
  %v142 = vpop.f32.mrf.mxu0
  %v143 = vadd.f32 %v68, %v142
  %144 = vdwg.mxu0
  %145 = vst [vmem:[#allocation2] sm:$0xff] %v126
  %146 = vst [vmem:[#allocation2 + $0x8] sm:$0xff] %v128
  %147 = vst [vmem:[#allocation2 + $0x10] sm:$0xff] %v131
  %148 = vst [vmem:[#allocation2 + $0x18] sm:$0xff] %v133
  %149 = vst [vmem:[#allocation2 + $0x20] sm:$0xff] %v136
  %150 = vst [vmem:[#allocation2 + $0x28] sm:$0xff] %v138
  %151 = vst [vmem:[#allocation2 + $0x30] sm:$0xff] %v141
  %152 = vst [vmem:[#allocation2 + $0x38] sm:$0xff] %v143
  %v153 = vld [vmem:[%s2] sm:$0xf]
  %v154 = vld [vmem:[%s2 + $0x4] sm:$0xf]
  %v155 = vld [vmem:[%s2 + $0x8] sm:$0xf]
  %v156 = vld [vmem:[%s2 + $0xc] sm:$0xf]
  %v157 = vld [vmem:[#allocation2] sm:$0xff]
  %v162 = vunpack.c.l.b16 %v153
  %v163 = vunpack.c.l.b16 %v154
  %v164 = vunpack.c.l.b16 %v155
  %v165 = vunpack.c.l.b16 %v156
  %v166 = vpack.c.b16 %v163, %v162
  %v167 = vpack.c.b16 %v165, %v164
  %vm170 = vcmask 261120
  %v172 = vsel %vm170, 0, 0
  %174 = vmatpush.bf16.msra.mxu0 0
  %175 = vmatpush.bf16.msra.mxu0 0
  %176 = vmatpush.bf16.msra.mxu0 0
  %177 = vmatpush.bf16.msra.mxu0 0
  %178 = vmatpush.bf16.msra.mxu0 0
  %179 = vmatpush.bf16.msra.mxu0 0
  %180 = vmatpush.bf16.msra.mxu0 %v167
  %181 = vmatpush.bf16.msra.mxu0 %v166
  %182 = vmatmul.bf16.gmra.mxu0 %v172
  %v183 = vpop.f32.mrf.mxu0
  %v184 = vadd.f32 0.0, %v183
  %v185 = vpop.f32.mrf.mxu0
  %186 = vdwg.mxu0
  %v187 = vadd.f32 %v157, %v184
  %v188 = vxor.u32 %v187, 2147483648
  %v189 = vmul.f32 %v188, 1.442695
  %v190 = vpow.pop %v189
  %v191 = vadd.f32 %v190, 1.0
  %v192 = vrcp.pop %v191
  %v193 = vmul.f32 %v191, %v192
  %v194 = vsub.f32 1.0, %v193
  %v195 = vmul.f32 %v192, %v194
  %v196 = vadd.f32 %v192, %v195
  %vm197 = vweird.f32 %v191
  %vm198 = vweird.f32 %v192
  %vm199 = vmor %vm197, %vm198
  %v200 = vsel %vm199, %v192, %v196
  %v201 = vand.u32 2147483647, %v191
  %vm202 = vcmp.eq.f32.partialorder %v201, 8.507059e+37
  %v203 = vand.u32 %v191, 2147483648
  %v204 = vor.u32 1.1754944e-38, %v203
  %v205 = vsel %vm202, %v204, %v200
  %v206 = vmul.f32 1.0, %v205
  %v207 = vtanh.pop %v187
  %v208 = vsel %vm54, %v207, %v206
  %v209 = vmul.f32 %v208, 0.0
  %211 = vrot.lane.b32.xlu0 %v208, 64
  %v212 = vpop.permute.xlu0 %211
  %v214 = vmul.f32 %v208, %v212
  %216 = vrot.lane.b32.xlu0 %v214, 32
  %v217 = vpop.permute.xlu0 %216
  %v219 = vadd.f32 %v209, %v217
  %v220 = vtanh.pop %v219
  %222 = vrot.lane.b32.xlu0 %v220, 64
  %v223 = vpop.permute.xlu0 %222
  %v225 = vmul.f32 %v208, %v223
  %v226 = vld [vmem:[#allocation2 + $0x8] sm:$0xff]
  %v227 = vpack.c.bf16 %v225, %v225
  %229 = vrot.lane.b32.xlu0 %v227, 32
  %v230 = vpop.permute.xlu0 %229
  %v232 = vsel %vm170, %v230, 0
  %234 = vmatpush.bf16.msra.mxu0 0
  %235 = vmatpush.bf16.msra.mxu0 0
  %236 = vmatpush.bf16.msra.mxu0 0
  %237 = vmatpush.bf16.msra.mxu0 0
  %238 = vmatpush.bf16.msra.mxu0 0
  %239 = vmatpush.bf16.msra.mxu0 0
  %240 = vmatpush.bf16.msra.mxu0 %v167
  %241 = vmatpush.bf16.msra.mxu0 %v166
  %242 = vmatmul.bf16.gmra.mxu0 %v232
  %v243 = vpop.f32.mrf.mxu0
  %v244 = vadd.f32 0.0, %v243
  %v245 = vpop.f32.mrf.mxu0
  %246 = vdwg.mxu0
  %v247 = vadd.f32 %v226, %v244
  %v248 = vxor.u32 %v247, 2147483648
  %v249 = vmul.f32 %v248, 1.442695
  %v250 = vpow.pop %v249
  %v251 = vadd.f32 %v250, 1.0
  %v252 = vrcp.pop %v251
  %v253 = vmul.f32 %v251, %v252
  %v254 = vsub.f32 1.0, %v253
  %v255 = vmul.f32 %v252, %v254
  %v256 = vadd.f32 %v252, %v255
  %vm257 = vweird.f32 %v251
  %vm258 = vweird.f32 %v252
  %vm259 = vmor %vm257, %vm258
  %v260 = vsel %vm259, %v252, %v256
  %v261 = vand.u32 2147483647, %v251
  %vm262 = vcmp.eq.f32.partialorder %v261, 8.507059e+37
  %v263 = vand.u32 %v251, 2147483648
  %v264 = vor.u32 1.1754944e-38, %v263
  %v265 = vsel %vm262, %v264, %v260
  %v266 = vmul.f32 1.0, %v265
  %v267 = vtanh.pop %v247
  %v268 = vsel %vm54, %v267, %v266
  %v269 = vmul.f32 %v268, %v219
  %271 = vrot.lane.b32.xlu0 %v268, 64
  %v272 = vpop.permute.xlu0 %271
  %v274 = vmul.f32 %v268, %v272
  %276 = vrot.lane.b32.xlu0 %v274, 32
  %v277 = vpop.permute.xlu0 %276
  %v279 = vadd.f32 %v269, %v277
  %v280 = vtanh.pop %v279
  %282 = vrot.lane.b32.xlu0 %v280, 64
  %v283 = vpop.permute.xlu0 %282
  %v285 = vmul.f32 %v268, %v283
  %v286 = vld [vmem:[#allocation2 + $0x10] sm:$0xff]
  %v287 = vpack.c.bf16 %v285, %v285
  %289 = vrot.lane.b32.xlu0 %v287, 32
  %v290 = vpop.permute.xlu0 %289
  %v292 = vsel %vm170, %v290, 0
  %294 = vmatpush.bf16.msra.mxu0 0
  %295 = vmatpush.bf16.msra.mxu0 0
  %296 = vmatpush.bf16.msra.mxu0 0
  %297 = vmatpush.bf16.msra.mxu0 0
  %298 = vmatpush.bf16.msra.mxu0 0
  %299 = vmatpush.bf16.msra.mxu0 0
  %300 = vmatpush.bf16.msra.mxu0 %v167
  %301 = vmatpush.bf16.msra.mxu0 %v166
  %302 = vmatmul.bf16.gmra.mxu0 %v292
  %v303 = vpop.f32.mrf.mxu0
  %v304 = vadd.f32 0.0, %v303
  %v305 = vpop.f32.mrf.mxu0
  %306 = vdwg.mxu0
  %v307 = vadd.f32 %v286, %v304
  %v308 = vxor.u32 %v307, 2147483648
  %v309 = vmul.f32 %v308, 1.442695
  %v310 = vpow.pop %v309
  %v311 = vadd.f32 %v310, 1.0
  %v312 = vrcp.pop %v311
  %v313 = vmul.f32 %v311, %v312
  %v314 = vsub.f32 1.0, %v313
  %v315 = vmul.f32 %v312, %v314
  %v316 = vadd.f32 %v312, %v315
  %vm317 = vweird.f32 %v311
  %vm318 = vweird.f32 %v312
  %vm319 = vmor %vm317, %vm318
  %v320 = vsel %vm319, %v312, %v316
  %v321 = vand.u32 2147483647, %v311
  %vm322 = vcmp.eq.f32.partialorder %v321, 8.507059e+37
  %v323 = vand.u32 %v311, 2147483648
  %v324 = vor.u32 1.1754944e-38, %v323
  %v325 = vsel %vm322, %v324, %v320
  %v326 = vmul.f32 1.0, %v325
  %v327 = vtanh.pop %v307
  %v328 = vsel %vm54, %v327, %v326
  %v329 = vmul.f32 %v328, %v279
  %331 = vrot.lane.b32.xlu0 %v328, 64
  %v332 = vpop.permute.xlu0 %331
  %v334 = vmul.f32 %v328, %v332
  %336 = vrot.lane.b32.xlu0 %v334, 32
  %v337 = vpop.permute.xlu0 %336
  %v339 = vadd.f32 %v329, %v337
  %v340 = vtanh.pop %v339
  %342 = vrot.lane.b32.xlu0 %v340, 64
  %v343 = vpop.permute.xlu0 %342
  %v345 = vmul.f32 %v328, %v343
  %v346 = vld [vmem:[#allocation2 + $0x18] sm:$0xff]
  %v347 = vpack.c.bf16 %v345, %v345
  %349 = vrot.lane.b32.xlu0 %v347, 32
  %v350 = vpop.permute.xlu0 %349
  %v352 = vsel %vm170, %v350, 0
  %354 = vmatpush.bf16.msra.mxu0 0
  %355 = vmatpush.bf16.msra.mxu0 0
  %356 = vmatpush.bf16.msra.mxu0 0
  %357 = vmatpush.bf16.msra.mxu0 0
  %358 = vmatpush.bf16.msra.mxu0 0
  %359 = vmatpush.bf16.msra.mxu0 0
  %360 = vmatpush.bf16.msra.mxu0 %v167
  %361 = vmatpush.bf16.msra.mxu0 %v166
  %362 = vmatmul.bf16.gmra.mxu0 %v352
  %v363 = vpop.f32.mrf.mxu0
  %v364 = vadd.f32 0.0, %v363
  %v365 = vpop.f32.mrf.mxu0
  %366 = vdwg.mxu0
  %v367 = vadd.f32 %v346, %v364
  %v368 = vxor.u32 %v367, 2147483648
  %v369 = vmul.f32 %v368, 1.442695
  %v370 = vpow.pop %v369
  %v371 = vadd.f32 %v370, 1.0
  %v372 = vrcp.pop %v371
  %v373 = vmul.f32 %v371, %v372
  %v374 = vsub.f32 1.0, %v373
  %v375 = vmul.f32 %v372, %v374
  %v376 = vadd.f32 %v372, %v375
  %vm377 = vweird.f32 %v371
  %vm378 = vweird.f32 %v372
  %vm379 = vmor %vm377, %vm378
  %v380 = vsel %vm379, %v372, %v376
  %v381 = vand.u32 2147483647, %v371
  %vm382 = vcmp.eq.f32.partialorder %v381, 8.507059e+37
  %v383 = vand.u32 %v371, 2147483648
  %v384 = vor.u32 1.1754944e-38, %v383
  %v385 = vsel %vm382, %v384, %v380
  %v386 = vmul.f32 1.0, %v385
  %v387 = vtanh.pop %v367
  %v388 = vsel %vm54, %v387, %v386
  %v389 = vmul.f32 %v388, %v339
  %391 = vrot.lane.b32.xlu0 %v388, 64
  %v392 = vpop.permute.xlu0 %391
  %v394 = vmul.f32 %v388, %v392
  %396 = vrot.lane.b32.xlu0 %v394, 32
  %v397 = vpop.permute.xlu0 %396
  %v399 = vadd.f32 %v389, %v397
  %v400 = vtanh.pop %v399
  %402 = vrot.lane.b32.xlu0 %v400, 64
  %v403 = vpop.permute.xlu0 %402
  %v405 = vmul.f32 %v388, %v403
  %v406 = vld [vmem:[#allocation2 + $0x20] sm:$0xff]
  %v407 = vpack.c.bf16 %v405, %v405
  %409 = vrot.lane.b32.xlu0 %v407, 32
  %v410 = vpop.permute.xlu0 %409
  %v412 = vsel %vm170, %v410, 0
  %414 = vmatpush.bf16.msra.mxu0 0
  %415 = vmatpush.bf16.msra.mxu0 0
  %416 = vmatpush.bf16.msra.mxu0 0
  %417 = vmatpush.bf16.msra.mxu0 0
  %418 = vmatpush.bf16.msra.mxu0 0
  %419 = vmatpush.bf16.msra.mxu0 0
  %420 = vmatpush.bf16.msra.mxu0 %v167
  %421 = vmatpush.bf16.msra.mxu0 %v166
  %422 = vmatmul.bf16.gmra.mxu0 %v412
  %v423 = vpop.f32.mrf.mxu0
  %v424 = vadd.f32 0.0, %v423
  %v425 = vpop.f32.mrf.mxu0
  %426 = vdwg.mxu0
  %v427 = vadd.f32 %v406, %v424
  %v428 = vxor.u32 %v427, 2147483648
  %v429 = vmul.f32 %v428, 1.442695
  %v430 = vpow.pop %v429
  %v431 = vadd.f32 %v430, 1.0
  %v432 = vrcp.pop %v431
  %v433 = vmul.f32 %v431, %v432
  %v434 = vsub.f32 1.0, %v433
  %v435 = vmul.f32 %v432, %v434
  %v436 = vadd.f32 %v432, %v435
  %vm437 = vweird.f32 %v431
  %vm438 = vweird.f32 %v432
  %vm439 = vmor %vm437, %vm438
  %v440 = vsel %vm439, %v432, %v436
  %v441 = vand.u32 2147483647, %v431
  %vm442 = vcmp.eq.f32.partialorder %v441, 8.507059e+37
  %v443 = vand.u32 %v431, 2147483648
  %v444 = vor.u32 1.1754944e-38, %v443
  %v445 = vsel %vm442, %v444, %v440
  %v446 = vmul.f32 1.0, %v445
  %v447 = vtanh.pop %v427
  %v448 = vsel %vm54, %v447, %v446
  %v449 = vmul.f32 %v448, %v399
  %451 = vrot.lane.b32.xlu0 %v448, 64
  %v452 = vpop.permute.xlu0 %451
  %v454 = vmul.f32 %v448, %v452
  %456 = vrot.lane.b32.xlu0 %v454, 32
  %v457 = vpop.permute.xlu0 %456
  %v459 = vadd.f32 %v449, %v457
  %v460 = vtanh.pop %v459
  %462 = vrot.lane.b32.xlu0 %v460, 64
  %v463 = vpop.permute.xlu0 %462
  %v465 = vmul.f32 %v448, %v463
  %v466 = vld [vmem:[#allocation2 + $0x28] sm:$0xff]
  %v467 = vpack.c.bf16 %v465, %v465
  %469 = vrot.lane.b32.xlu0 %v467, 32
  %v470 = vpop.permute.xlu0 %469
  %v472 = vsel %vm170, %v470, 0
  %474 = vmatpush.bf16.msra.mxu0 0
  %475 = vmatpush.bf16.msra.mxu0 0
  %476 = vmatpush.bf16.msra.mxu0 0
  %477 = vmatpush.bf16.msra.mxu0 0
  %478 = vmatpush.bf16.msra.mxu0 0
  %479 = vmatpush.bf16.msra.mxu0 0
  %480 = vmatpush.bf16.msra.mxu0 %v167
  %481 = vmatpush.bf16.msra.mxu0 %v166
  %482 = vmatmul.bf16.gmra.mxu0 %v472
  %v483 = vpop.f32.mrf.mxu0
  %v484 = vadd.f32 0.0, %v483
  %v485 = vpop.f32.mrf.mxu0
  %486 = vdwg.mxu0
  %v487 = vadd.f32 %v466, %v484
  %v488 = vxor.u32 %v487, 2147483648
  %v489 = vmul.f32 %v488, 1.442695
  %v490 = vpow.pop %v489
  %v491 = vadd.f32 %v490, 1.0
  %v492 = vrcp.pop %v491
  %v493 = vmul.f32 %v491, %v492
  %v494 = vsub.f32 1.0, %v493
  %v495 = vmul.f32 %v492, %v494
  %v496 = vadd.f32 %v492, %v495
  %vm497 = vweird.f32 %v491
  %vm498 = vweird.f32 %v492
  %vm499 = vmor %vm497, %vm498
  %v500 = vsel %vm499, %v492, %v496
  %v501 = vand.u32 2147483647, %v491
  %vm502 = vcmp.eq.f32.partialorder %v501, 8.507059e+37
  %v503 = vand.u32 %v491, 2147483648
  %v504 = vor.u32 1.1754944e-38, %v503
  %v505 = vsel %vm502, %v504, %v500
  %v506 = vmul.f32 1.0, %v505
  %v507 = vtanh.pop %v487
  %v508 = vsel %vm54, %v507, %v506
  %v509 = vmul.f32 %v508, %v459
  %511 = vrot.lane.b32.xlu0 %v508, 64
  %v512 = vpop.permute.xlu0 %511
  %v514 = vmul.f32 %v508, %v512
  %516 = vrot.lane.b32.xlu0 %v514, 32
  %v517 = vpop.permute.xlu0 %516
  %v519 = vadd.f32 %v509, %v517
  %v520 = vtanh.pop %v519
  %522 = vrot.lane.b32.xlu0 %v520, 64
  %v523 = vpop.permute.xlu0 %522
  %v525 = vmul.f32 %v508, %v523
  %v526 = vld [vmem:[#allocation2 + $0x30] sm:$0xff]
  %v527 = vpack.c.bf16 %v525, %v525
  %529 = vrot.lane.b32.xlu0 %v527, 32
  %v530 = vpop.permute.xlu0 %529
  %v532 = vsel %vm170, %v530, 0
  %534 = vmatpush.bf16.msra.mxu0 0
  %535 = vmatpush.bf16.msra.mxu0 0
  %536 = vmatpush.bf16.msra.mxu0 0
  %537 = vmatpush.bf16.msra.mxu0 0
  %538 = vmatpush.bf16.msra.mxu0 0
  %539 = vmatpush.bf16.msra.mxu0 0
  %540 = vmatpush.bf16.msra.mxu0 %v167
  %541 = vmatpush.bf16.msra.mxu0 %v166
  %542 = vmatmul.bf16.gmra.mxu0 %v532
  %v543 = vpop.f32.mrf.mxu0
  %v544 = vadd.f32 0.0, %v543
  %v545 = vpop.f32.mrf.mxu0
  %546 = vdwg.mxu0
  %v547 = vadd.f32 %v526, %v544
  %v548 = vxor.u32 %v547, 2147483648
  %v549 = vmul.f32 %v548, 1.442695
  %v550 = vpow.pop %v549
  %v551 = vadd.f32 %v550, 1.0
  %v552 = vrcp.pop %v551
  %v553 = vmul.f32 %v551, %v552
  %v554 = vsub.f32 1.0, %v553
  %v555 = vmul.f32 %v552, %v554
  %v556 = vadd.f32 %v552, %v555
  %vm557 = vweird.f32 %v551
  %vm558 = vweird.f32 %v552
  %vm559 = vmor %vm557, %vm558
  %v560 = vsel %vm559, %v552, %v556
  %v561 = vand.u32 2147483647, %v551
  %vm562 = vcmp.eq.f32.partialorder %v561, 8.507059e+37
  %v563 = vand.u32 %v551, 2147483648
  %v564 = vor.u32 1.1754944e-38, %v563
  %v565 = vsel %vm562, %v564, %v560
  %v566 = vmul.f32 1.0, %v565
  %v567 = vtanh.pop %v547
  %v568 = vsel %vm54, %v567, %v566
  %v569 = vmul.f32 %v568, %v519
  %571 = vrot.lane.b32.xlu0 %v568, 64
  %v572 = vpop.permute.xlu0 %571
  %v574 = vmul.f32 %v568, %v572
  %576 = vrot.lane.b32.xlu0 %v574, 32
  %v577 = vpop.permute.xlu0 %576
  %v579 = vadd.f32 %v569, %v577
  %v580 = vtanh.pop %v579
  %582 = vrot.lane.b32.xlu0 %v580, 64
  %v583 = vpop.permute.xlu0 %582
  %v585 = vmul.f32 %v568, %v583
  %v586 = vld [vmem:[#allocation2 + $0x38] sm:$0xff]
  %v587 = vpack.c.bf16 %v585, %v585
  %589 = vrot.lane.b32.xlu0 %v587, 32
  %v590 = vpop.permute.xlu0 %589
  %v592 = vsel %vm170, %v590, 0
  %594 = vmatpush.bf16.msra.mxu0 0
  %595 = vmatpush.bf16.msra.mxu0 0
  %596 = vmatpush.bf16.msra.mxu0 0
  %597 = vmatpush.bf16.msra.mxu0 0
  %598 = vmatpush.bf16.msra.mxu0 0
  %599 = vmatpush.bf16.msra.mxu0 0
  %600 = vmatpush.bf16.msra.mxu0 %v167
  %601 = vmatpush.bf16.msra.mxu0 %v166
  %602 = vmatmul.bf16.gmra.mxu0 %v592
  %v603 = vpop.f32.mrf.mxu0
  %v604 = vadd.f32 0.0, %v603
  %v605 = vpop.f32.mrf.mxu0
  %606 = vdwg.mxu0
  %v607 = vadd.f32 %v586, %v604
  %v608 = vxor.u32 %v607, 2147483648
  %v609 = vmul.f32 %v608, 1.442695
  %v610 = vpow.pop %v609
  %v611 = vadd.f32 %v610, 1.0
  %v612 = vrcp.pop %v611
  %v613 = vmul.f32 %v611, %v612
  %v614 = vsub.f32 1.0, %v613
  %v615 = vmul.f32 %v612, %v614
  %v616 = vadd.f32 %v612, %v615
  %vm617 = vweird.f32 %v611
  %vm618 = vweird.f32 %v612
  %vm619 = vmor %vm617, %vm618
  %v620 = vsel %vm619, %v612, %v616
  %v621 = vand.u32 2147483647, %v611
  %vm622 = vcmp.eq.f32.partialorder %v621, 8.507059e+37
  %v623 = vand.u32 %v611, 2147483648
  %v624 = vor.u32 1.1754944e-38, %v623
  %v625 = vsel %vm622, %v624, %v620
  %v626 = vmul.f32 1.0, %v625
  %v627 = vtanh.pop %v607
  %v628 = vsel %vm54, %v627, %v626
  %v629 = vmul.f32 %v628, %v579
  %631 = vrot.lane.b32.xlu0 %v628, 64
  %v632 = vpop.permute.xlu0 %631
  %v634 = vmul.f32 %v628, %v632
  %636 = vrot.lane.b32.xlu0 %v634, 32
  %v637 = vpop.permute.xlu0 %636
  %v639 = vadd.f32 %v629, %v637
  %v640 = vtanh.pop %v639
  %642 = vrot.lane.b32.xlu0 %v640, 64
  %v643 = vpop.permute.xlu0 %642
  %v645 = vmul.f32 %v628, %v643
  %v646 = vld [vmem:[%s4] sm:$0xff]
  %v647 = vld [vmem:[%s4 + $0x8] sm:$0xff]
  %v648 = vld [vmem:[%s4 + $0x10] sm:$0xff]
  %v649 = vld [vmem:[%s4 + $0x18] sm:$0xff]
  %v650 = vld [vmem:[%s5] sm:$0x1]
  %v652 = vperm.slane %v650, 0
  %655 = vrot.lane.b32.xlu0 %v645, 32
  %v656 = vpop.permute.xlu0 %655
  %v657 = vsel %vm170, %v656, 0
  %659 = vmatpush.msra.mxu0 0.0
  %660 = vmatpush.msra.mxu0 0.0
  %661 = vmatpush.msra.mxu0 0.0
  %662 = vmatpush.msra.mxu0 0.0
  %663 = vmatpush.msra.mxu0 0.0
  %664 = vmatpush.msra.mxu0 0.0
  %665 = vmatpush.msra.mxu0 0.0
  %666 = vmatpush.msra.mxu0 0.0
  %667 = vmatpush.msra.mxu0 0.0
  %668 = vmatpush.msra.mxu0 0.0
  %669 = vmatpush.msra.mxu0 0.0
  %670 = vmatpush.msra.mxu0 0.0
  %671 = vmatpush.msra.mxu0 %v649
  %672 = vmatpush.msra.mxu0 %v648
  %673 = vmatpush.msra.mxu0 %v647
  %674 = vmatpush.msra.mxu0 %v646
  %675 = vmatmul.f32.gmra.mxu0 %v657
  %v676 = vpop.f32.mrf.mxu0
  %v677 = vadd.f32 %v652, %v676
  %678 = vdwg.mxu0
  %v679 = vmul.f32 %v677, 0.5
  %v680 = vmul.f32 %v679, 1.442695
  %v681 = vpow.pop %v680
  %v682 = vld [vmem:[%s6] sm:$0xff]
  %684 = vrot.lane.b32.xlu0 %v681, 112
  %v685 = vpop.permute.xlu0 %684
  %v687 = vmul.f32 %v682, %v685
  %v688 = vadd.f32 %v687, %v677
  %v689 = vlaneseq
  %v690 = vshrl.u32 %v689, 7
  %vm691 = vcmp.lt.s32.totalorder %v690, 2
  %v692 = vsel %vm691, 1, 0
  %v693 = vcvt.s32.f32 %v692
  %v694 = vadd.f32 %v677, 1.0
  %v695 = vmul.f32 %v677, %v677
  %697 = vrot.lane.b32.xlu0 %v695, 16
  %v698 = vpop.permute.xlu0 %697
  %v700 = vsub.f32 %v694, %v698
  %v701 = vmul.f32 %v677, 1.442695
  %v702 = vpow.pop %v701
  %v703 = vsub.f32 %v700, %v702
  %v704 = vmul.f32 %v703, %v693
  %706 = vrot.lane.b32.xlu0 %v704, 112
  %v707 = vpop.permute.xlu0 %706
  %vm709 = vcmask 130048
  %v710 = vsel %vm709, %v707, 0.0
  %711 = vadd.xlane.f32.xlu0 %v710
  %v712 = vpop.xlane.xlu0 %711
  %v713 = vrot.slane %v712, 4
  %v714 = vadd.f32 %v712, %v713
  %v715 = vrot.slane %v714, 2
  %v716 = vadd.f32 %v714, %v715
  %v717 = vrot.slane %v716, 1
  %v718 = vadd.f32 %v716, %v717
  %s719 = vtos %v718
  %v720 = vstv %s719
  %v721 = vmul.f32 %v720, -0.5
  %v722 = vld [vmem:[%s10] sm:$0xf]
  %v723 = vld [vmem:[%s10 + $0x4] sm:$0xf]
  %v724 = vld [vmem:[%s10 + $0x8] sm:$0xf]
  %v725 = vld [vmem:[%s10 + $0xc] sm:$0xf]
  %v726 = vpack.c.bf16 %v688, %v688
  %v727 = vld [vmem:[%s9] sm:$0xf]
  %v728 = vld [vmem:[%s9 + $0x4] sm:$0xf]
  %v729 = vld [vmem:[%s11] sm:$0x1]
  %v731 = vperm.slane %v729, 0
  %v735 = vunpack.c.l.b16 %v727
  %v736 = vunpack.c.l.b16 %v728
  %v737 = vpack.c.b16 %v736, %v735
  %v740 = vsel %vm709, %v726, 0
  %742 = vmatpush.bf16.msra.mxu0 0
  %743 = vmatpush.bf16.msra.mxu0 0
  %744 = vmatpush.bf16.msra.mxu0 0
  %745 = vmatpush.bf16.msra.mxu0 0
  %746 = vmatpush.bf16.msra.mxu0 0
  %747 = vmatpush.bf16.msra.mxu0 0
  %748 = vmatpush.bf16.msra.mxu0 0
  %749 = vmatpush.bf16.msra.mxu0 %v737
  %750 = vmatmul.bf16.gmra.mxu0 %v740
  %v751 = vpop.f32.mrf.mxu0
  %v752 = vadd.f32 %v731, %v751
  %v753 = vpop.f32.mrf.mxu0
  %754 = vdwg.mxu0
  %v755 = vld [vmem:[%s7] sm:$0xf]
  %v756 = vld [vmem:[%s7 + $0x4] sm:$0xf]
  %v757 = vld [vmem:[%s7 + $0x8] sm:$0xf]
  %v758 = vld [vmem:[%s7 + $0xc] sm:$0xf]
  %v759 = vld [vmem:[%s7 + $0x10] sm:$0xf]
  %v760 = vld [vmem:[%s7 + $0x14] sm:$0xf]
  %v761 = vld [vmem:[%s7 + $0x18] sm:$0xf]
  %v762 = vld [vmem:[%s7 + $0x1c] sm:$0xf]
  %v763 = vld [vmem:[%s7 + $0x20] sm:$0xf]
  %v764 = vld [vmem:[%s8] sm:$0xf]
  %v765 = vld [vmem:[%s8 + $0x4] sm:$0xf]
  %v775 = vunpack.c.l.b16 %v755
  %v776 = vunpack.c.l.b16 %v756
  %v777 = vunpack.c.l.b16 %v757
  %v778 = vunpack.c.l.b16 %v758
  %v779 = vunpack.c.l.b16 %v759
  %v780 = vunpack.c.l.b16 %v760
  %v781 = vunpack.c.l.b16 %v761
  %v782 = vunpack.c.l.b16 %v762
  %v783 = vunpack.c.l.b16 %v763
  %v784 = vpack.c.b16 %v776, %v775
  %v785 = vpack.c.b16 %v778, %v777
  %v786 = vpack.c.b16 %v780, %v779
  %v787 = vpack.c.b16 %v782, %v781
  %v788 = vpack.c.b16 %v783, %v783
  %v791 = vunpack.c.l.b16 %v764
  %v792 = vunpack.c.l.b16 %v765
  %v793 = vpack.c.b16 %v792, %v791
  %v796 = vsel %vm709, %v784, 0
  %v799 = vsel %vm709, %v785, 0
  %v802 = vsel %vm709, %v786, 0
  %v805 = vsel %vm709, %v787, 0
  %v808 = vsel %vm709, %v788, 0
  %810 = vmatpush.bf16.msra.mxu0 0
  %811 = vmatpush.bf16.msra.mxu0 0
  %812 = vmatpush.bf16.msra.mxu0 0
  %813 = vmatpush.bf16.msra.mxu0 0
  %814 = vmatpush.bf16.msra.mxu0 0
  %815 = vmatpush.bf16.msra.mxu0 0
  %816 = vmatpush.bf16.msra.mxu0 0
  %817 = vmatpush.bf16.msra.mxu0 %v793
  %818 = vmatmul.bf16.gmra.mxu0 %v796
  %v819 = vpop.f32.mrf.mxu0
  %v820 = vadd.f32 0.0, %v819
  %v821 = vpop.f32.mrf.mxu0
  %v822 = vadd.f32 0.0, %v821
  %823 = vmatmul.bf16.gmra.mxu0 %v799
  %v824 = vpop.f32.mrf.mxu0
  %v825 = vadd.f32 0.0, %v824
  %v826 = vpop.f32.mrf.mxu0
  %v827 = vadd.f32 0.0, %v826
  %828 = vmatmul.bf16.gmra.mxu0 %v802
  %v829 = vpop.f32.mrf.mxu0
  %v830 = vadd.f32 0.0, %v829
  %v831 = vpop.f32.mrf.mxu0
  %v832 = vadd.f32 0.0, %v831
  %833 = vmatmul.bf16.gmra.mxu0 %v805
  %v834 = vpop.f32.mrf.mxu0
  %v835 = vadd.f32 0.0, %v834
  %v836 = vpop.f32.mrf.mxu0
  %v837 = vadd.f32 0.0, %v836
  %838 = vmatmul.bf16.gmra.mxu0 %v808
  %v839 = vpop.f32.mrf.mxu0
  %v840 = vadd.f32 0.0, %v839
  %v841 = vpop.f32.mrf.mxu0
  %842 = vdwg.mxu0
  %843 = vst [vmem:[#allocation3] sm:$0xff] %v820
  %844 = vst [vmem:[#allocation3 + $0x8] sm:$0xff] %v822
  %845 = vst [vmem:[#allocation3 + $0x10] sm:$0xff] %v825
  %846 = vst [vmem:[#allocation3 + $0x18] sm:$0xff] %v827
  %847 = vst [vmem:[#allocation3 + $0x20] sm:$0xff] %v830
  %848 = vst [vmem:[#allocation3 + $0x28] sm:$0xff] %v832
  %849 = vst [vmem:[#allocation3 + $0x30] sm:$0xff] %v835
  %850 = vst [vmem:[#allocation3 + $0x38] sm:$0xff] %v837
  %851 = vst [vmem:[#allocation3 + $0x40] sm:$0xff] %v840
  %v852 = vld [vmem:[#allocation3] sm:$0xff]
  %v853 = vadd.f32 %v852, %v752
  %854 = vst [vmem:[#allocation3] sm:$0xff] %v853
  %v855 = vld [vmem:[#allocation3 + $0x8] sm:$0xff]
  %v856 = vadd.f32 %v855, %v752
  %857 = vst [vmem:[#allocation3 + $0x8] sm:$0xff] %v856
  %v858 = vld [vmem:[#allocation3 + $0x10] sm:$0xff]
  %v859 = vadd.f32 %v858, %v752
  %860 = vst [vmem:[#allocation3 + $0x10] sm:$0xff] %v859
  %v861 = vld [vmem:[#allocation3 + $0x18] sm:$0xff]
  %v862 = vadd.f32 %v861, %v752
  %863 = vst [vmem:[#allocation3 + $0x18] sm:$0xff] %v862
  %v864 = vld [vmem:[#allocation3 + $0x20] sm:$0xff]
  %v865 = vadd.f32 %v864, %v752
  %866 = vst [vmem:[#allocation3 + $0x20] sm:$0xff] %v865
  %v867 = vld [vmem:[#allocation3 + $0x28] sm:$0xff]
  %v868 = vadd.f32 %v867, %v752
  %869 = vst [vmem:[#allocation3 + $0x28] sm:$0xff] %v868
  %v870 = vld [vmem:[#allocation3 + $0x30] sm:$0xff]
  %v871 = vadd.f32 %v870, %v752
  %872 = vst [vmem:[#allocation3 + $0x30] sm:$0xff] %v871
  %v873 = vld [vmem:[#allocation3 + $0x38] sm:$0xff]
  %v874 = vadd.f32 %v873, %v752
  %875 = vst [vmem:[#allocation3 + $0x38] sm:$0xff] %v874
  %v876 = vld [vmem:[#allocation3 + $0x40] sm:$0xff]
  %v877 = vadd.f32 %v876, %v752
  %878 = vst [vmem:[#allocation3 + $0x40] sm:$0xff] %v877
  %v879 = vld [vmem:[#allocation3] sm:$0xff]
  %v880 = vpack.c.bf16 %v645, %v645
  %882 = vrot.lane.b32.xlu0 %v880, 32
  %v883 = vpop.permute.xlu0 %882
  %v888 = vunpack.c.l.b16 %v722
  %v889 = vunpack.c.l.b16 %v723
  %v890 = vunpack.c.l.b16 %v724
  %v891 = vunpack.c.l.b16 %v725
  %v892 = vpack.c.b16 %v889, %v888
  %v893 = vpack.c.b16 %v891, %v890
  %v897 = vsel %vm170, %v883, 0
  %899 = vmatpush.bf16.msra.mxu0 0
  %900 = vmatpush.bf16.msra.mxu0 0
  %901 = vmatpush.bf16.msra.mxu0 0
  %902 = vmatpush.bf16.msra.mxu0 0
  %903 = vmatpush.bf16.msra.mxu0 0
  %904 = vmatpush.bf16.msra.mxu0 0
  %905 = vmatpush.bf16.msra.mxu0 %v893
  %906 = vmatpush.bf16.msra.mxu0 %v892
  %907 = vmatmul.bf16.gmra.mxu0 %v897
  %v908 = vpop.f32.mrf.mxu0
  %v909 = vadd.f32 0.0, %v908
  %v910 = vpop.f32.mrf.mxu0
  %911 = vdwg.mxu0
  %v912 = vadd.f32 %v879, %v909
  %v913 = vxor.u32 %v912, 2147483648
  %v914 = vmul.f32 %v913, 1.442695
  %v915 = vpow.pop %v914
  %v916 = vadd.f32 %v915, 1.0
  %v917 = vrcp.pop %v916
  %v918 = vmul.f32 %v916, %v917
  %v919 = vsub.f32 1.0, %v918
  %v920 = vmul.f32 %v917, %v919
  %v921 = vadd.f32 %v917, %v920
  %vm922 = vweird.f32 %v916
  %vm923 = vweird.f32 %v917
  %vm924 = vmor %vm922, %vm923
  %v925 = vsel %vm924, %v917, %v921
  %v926 = vand.u32 2147483647, %v916
  %vm927 = vcmp.eq.f32.partialorder %v926, 8.507059e+37
  %v928 = vand.u32 %v916, 2147483648
  %v929 = vor.u32 1.1754944e-38, %v928
  %v930 = vsel %vm927, %v929, %v925
  %v931 = vmul.f32 1.0, %v930
  %v932 = vtanh.pop %v912
  %v933 = vsel %vm54, %v932, %v931
  %v934 = vmul.f32 %v933, 0.0
  %936 = vrot.lane.b32.xlu0 %v933, 64
  %v937 = vpop.permute.xlu0 %936
  %v939 = vmul.f32 %v933, %v937
  %941 = vrot.lane.b32.xlu0 %v939, 32
  %v942 = vpop.permute.xlu0 %941
  %v944 = vadd.f32 %v934, %v942
  %v945 = vtanh.pop %v944
  %947 = vrot.lane.b32.xlu0 %v945, 64
  %v948 = vpop.permute.xlu0 %947
  %v950 = vmul.f32 %v933, %v948
  %952 = vrot.lane.b32.xlu0 %v950, 32
  %v953 = vpop.permute.xlu0 %952
  %955 = vst.msk [vmem:[#allocation4] sm:$0xff] %vm170, %v953
  %v956 = vld [vmem:[#allocation3 + $0x8] sm:$0xff]
  %v957 = vpack.c.bf16 %v950, %v950
  %959 = vrot.lane.b32.xlu0 %v957, 32
  %v960 = vpop.permute.xlu0 %959
  %v962 = vsel %vm170, %v960, 0
  %964 = vmatpush.bf16.msra.mxu0 0
  %965 = vmatpush.bf16.msra.mxu0 0
  %966 = vmatpush.bf16.msra.mxu0 0
  %967 = vmatpush.bf16.msra.mxu0 0
  %968 = vmatpush.bf16.msra.mxu0 0
  %969 = vmatpush.bf16.msra.mxu0 0
  %970 = vmatpush.bf16.msra.mxu0 %v893
  %971 = vmatpush.bf16.msra.mxu0 %v892
  %972 = vmatmul.bf16.gmra.mxu0 %v962
  %v973 = vpop.f32.mrf.mxu0
  %v974 = vadd.f32 0.0, %v973
  %v975 = vpop.f32.mrf.mxu0
  %976 = vdwg.mxu0
  %v977 = vadd.f32 %v956, %v974
  %v978 = vxor.u32 %v977, 2147483648
  %v979 = vmul.f32 %v978, 1.442695
  %v980 = vpow.pop %v979
  %v981 = vadd.f32 %v980, 1.0
  %v982 = vrcp.pop %v981
  %v983 = vmul.f32 %v981, %v982
  %v984 = vsub.f32 1.0, %v983
  %v985 = vmul.f32 %v982, %v984
  %v986 = vadd.f32 %v982, %v985
  %vm987 = vweird.f32 %v981
  %vm988 = vweird.f32 %v982
  %vm989 = vmor %vm987, %vm988
  %v990 = vsel %vm989, %v982, %v986
  %v991 = vand.u32 2147483647, %v981
  %vm992 = vcmp.eq.f32.partialorder %v991, 8.507059e+37
  %v993 = vand.u32 %v981, 2147483648
  %v994 = vor.u32 1.1754944e-38, %v993
  %v995 = vsel %vm992, %v994, %v990
  %v996 = vmul.f32 1.0, %v995
  %v997 = vtanh.pop %v977
  %v998 = vsel %vm54, %v997, %v996
  %v999 = vmul.f32 %v998, %v944
  %1001 = vrot.lane.b32.xlu0 %v998, 64
  %v1002 = vpop.permute.xlu0 %1001
  %v1004 = vmul.f32 %v998, %v1002
  %1006 = vrot.lane.b32.xlu0 %v1004, 32
  %v1007 = vpop.permute.xlu0 %1006
  %v1009 = vadd.f32 %v999, %v1007
  %v1010 = vtanh.pop %v1009
  %1012 = vrot.lane.b32.xlu0 %v1010, 64
  %v1013 = vpop.permute.xlu0 %1012
  %v1015 = vmul.f32 %v998, %v1013
  %1017 = vrot.lane.b32.xlu0 %v1015, 32
  %v1018 = vpop.permute.xlu0 %1017
  %1020 = vst.msk [vmem:[#allocation4 + $0x8] sm:$0xff] %vm170, %v1018
  %v1021 = vld [vmem:[#allocation3 + $0x10] sm:$0xff]
  %v1022 = vpack.c.bf16 %v1015, %v1015
  %1024 = vrot.lane.b32.xlu0 %v1022, 32
  %v1025 = vpop.permute.xlu0 %1024
  %v1027 = vsel %vm170, %v1025, 0
  %1029 = vmatpush.bf16.msra.mxu0 0
  %1030 = vmatpush.bf16.msra.mxu0 0
  %1031 = vmatpush.bf16.msra.mxu0 0
  %1032 = vmatpush.bf16.msra.mxu0 0
  %1033 = vmatpush.bf16.msra.mxu0 0
  %1034 = vmatpush.bf16.msra.mxu0 0
  %1035 = vmatpush.bf16.msra.mxu0 %v893
  %1036 = vmatpush.bf16.msra.mxu0 %v892
  %1037 = vmatmul.bf16.gmra.mxu0 %v1027
  %v1038 = vpop.f32.mrf.mxu0
  %v1039 = vadd.f32 0.0, %v1038
  %v1040 = vpop.f32.mrf.mxu0
  %1041 = vdwg.mxu0
  %v1042 = vadd.f32 %v1021, %v1039
  %v1043 = vxor.u32 %v1042, 2147483648
  %v1044 = vmul.f32 %v1043, 1.442695
  %v1045 = vpow.pop %v1044
  %v1046 = vadd.f32 %v1045, 1.0
  %v1047 = vrcp.pop %v1046
  %v1048 = vmul.f32 %v1046, %v1047
  %v1049 = vsub.f32 1.0, %v1048
  %v1050 = vmul.f32 %v1047, %v1049
  %v1051 = vadd.f32 %v1047, %v1050
  %vm1052 = vweird.f32 %v1046
  %vm1053 = vweird.f32 %v1047
  %vm1054 = vmor %vm1052, %vm1053
  %v1055 = vsel %vm1054, %v1047, %v1051
  %v1056 = vand.u32 2147483647, %v1046
  %vm1057 = vcmp.eq.f32.partialorder %v1056, 8.507059e+37
  %v1058 = vand.u32 %v1046, 2147483648
  %v1059 = vor.u32 1.1754944e-38, %v1058
  %v1060 = vsel %vm1057, %v1059, %v1055
  %v1061 = vmul.f32 1.0, %v1060
  %v1062 = vtanh.pop %v1042
  %v1063 = vsel %vm54, %v1062, %v1061
  %v1064 = vmul.f32 %v1063, %v1009
  %1066 = vrot.lane.b32.xlu0 %v1063, 64
  %v1067 = vpop.permute.xlu0 %1066
  %v1069 = vmul.f32 %v1063, %v1067
  %1071 = vrot.lane.b32.xlu0 %v1069, 32
  %v1072 = vpop.permute.xlu0 %1071
  %v1074 = vadd.f32 %v1064, %v1072
  %v1075 = vtanh.pop %v1074
  %1077 = vrot.lane.b32.xlu0 %v1075, 64
  %v1078 = vpop.permute.xlu0 %1077
  %v1080 = vmul.f32 %v1063, %v1078
  %1082 = vrot.lane.b32.xlu0 %v1080, 32
  %v1083 = vpop.permute.xlu0 %1082
  %1085 = vst.msk [vmem:[#allocation4 + $0x10] sm:$0xff] %vm170, %v1083
  %v1086 = vld [vmem:[#allocation3 + $0x18] sm:$0xff]
  %v1087 = vpack.c.bf16 %v1080, %v1080
  %1089 = vrot.lane.b32.xlu0 %v1087, 32
  %v1090 = vpop.permute.xlu0 %1089
  %v1092 = vsel %vm170, %v1090, 0
  %1094 = vmatpush.bf16.msra.mxu0 0
  %1095 = vmatpush.bf16.msra.mxu0 0
  %1096 = vmatpush.bf16.msra.mxu0 0
  %1097 = vmatpush.bf16.msra.mxu0 0
  %1098 = vmatpush.bf16.msra.mxu0 0
  %1099 = vmatpush.bf16.msra.mxu0 0
  %1100 = vmatpush.bf16.msra.mxu0 %v893
  %1101 = vmatpush.bf16.msra.mxu0 %v892
  %1102 = vmatmul.bf16.gmra.mxu0 %v1092
  %v1103 = vpop.f32.mrf.mxu0
  %v1104 = vadd.f32 0.0, %v1103
  %v1105 = vpop.f32.mrf.mxu0
  %1106 = vdwg.mxu0
  %v1107 = vadd.f32 %v1086, %v1104
  %v1108 = vxor.u32 %v1107, 2147483648
  %v1109 = vmul.f32 %v1108, 1.442695
  %v1110 = vpow.pop %v1109
  %v1111 = vadd.f32 %v1110, 1.0
  %v1112 = vrcp.pop %v1111
  %v1113 = vmul.f32 %v1111, %v1112
  %v1114 = vsub.f32 1.0, %v1113
  %v1115 = vmul.f32 %v1112, %v1114
  %v1116 = vadd.f32 %v1112, %v1115
  %vm1117 = vweird.f32 %v1111
  %vm1118 = vweird.f32 %v1112
  %vm1119 = vmor %vm1117, %vm1118
  %v1120 = vsel %vm1119, %v1112, %v1116
  %v1121 = vand.u32 2147483647, %v1111
  %vm1122 = vcmp.eq.f32.partialorder %v1121, 8.507059e+37
  %v1123 = vand.u32 %v1111, 2147483648
  %v1124 = vor.u32 1.1754944e-38, %v1123
  %v1125 = vsel %vm1122, %v1124, %v1120
  %v1126 = vmul.f32 1.0, %v1125
  %v1127 = vtanh.pop %v1107
  %v1128 = vsel %vm54, %v1127, %v1126
  %v1129 = vmul.f32 %v1128, %v1074
  %1131 = vrot.lane.b32.xlu0 %v1128, 64
  %v1132 = vpop.permute.xlu0 %1131
  %v1134 = vmul.f32 %v1128, %v1132
  %1136 = vrot.lane.b32.xlu0 %v1134, 32
  %v1137 = vpop.permute.xlu0 %1136
  %v1139 = vadd.f32 %v1129, %v1137
  %v1140 = vtanh.pop %v1139
  %1142 = vrot.lane.b32.xlu0 %v1140, 64
  %v1143 = vpop.permute.xlu0 %1142
  %v1145 = vmul.f32 %v1128, %v1143
  %1147 = vrot.lane.b32.xlu0 %v1145, 32
  %v1148 = vpop.permute.xlu0 %1147
  %1150 = vst.msk [vmem:[#allocation4 + $0x18] sm:$0xff] %vm170, %v1148
  %v1151 = vld [vmem:[#allocation3 + $0x20] sm:$0xff]
  %v1152 = vpack.c.bf16 %v1145, %v1145
  %1154 = vrot.lane.b32.xlu0 %v1152, 32
  %v1155 = vpop.permute.xlu0 %1154
  %v1157 = vsel %vm170, %v1155, 0
  %1159 = vmatpush.bf16.msra.mxu0 0
  %1160 = vmatpush.bf16.msra.mxu0 0
  %1161 = vmatpush.bf16.msra.mxu0 0
  %1162 = vmatpush.bf16.msra.mxu0 0
  %1163 = vmatpush.bf16.msra.mxu0 0
  %1164 = vmatpush.bf16.msra.mxu0 0
  %1165 = vmatpush.bf16.msra.mxu0 %v893
  %1166 = vmatpush.bf16.msra.mxu0 %v892
  %1167 = vmatmul.bf16.gmra.mxu0 %v1157
  %v1168 = vpop.f32.mrf.mxu0
  %v1169 = vadd.f32 0.0, %v1168
  %v1170 = vpop.f32.mrf.mxu0
  %1171 = vdwg.mxu0
  %v1172 = vadd.f32 %v1151, %v1169
  %v1173 = vxor.u32 %v1172, 2147483648
  %v1174 = vmul.f32 %v1173, 1.442695
  %v1175 = vpow.pop %v1174
  %v1176 = vadd.f32 %v1175, 1.0
  %v1177 = vrcp.pop %v1176
  %v1178 = vmul.f32 %v1176, %v1177
  %v1179 = vsub.f32 1.0, %v1178
  %v1180 = vmul.f32 %v1177, %v1179
  %v1181 = vadd.f32 %v1177, %v1180
  %vm1182 = vweird.f32 %v1176
  %vm1183 = vweird.f32 %v1177
  %vm1184 = vmor %vm1182, %vm1183
  %v1185 = vsel %vm1184, %v1177, %v1181
  %v1186 = vand.u32 2147483647, %v1176
  %vm1187 = vcmp.eq.f32.partialorder %v1186, 8.507059e+37
  %v1188 = vand.u32 %v1176, 2147483648
  %v1189 = vor.u32 1.1754944e-38, %v1188
  %v1190 = vsel %vm1187, %v1189, %v1185
  %v1191 = vmul.f32 1.0, %v1190
  %v1192 = vtanh.pop %v1172
  %v1193 = vsel %vm54, %v1192, %v1191
  %v1194 = vmul.f32 %v1193, %v1139
  %1196 = vrot.lane.b32.xlu0 %v1193, 64
  %v1197 = vpop.permute.xlu0 %1196
  %v1199 = vmul.f32 %v1193, %v1197
  %1201 = vrot.lane.b32.xlu0 %v1199, 32
  %v1202 = vpop.permute.xlu0 %1201
  %v1204 = vadd.f32 %v1194, %v1202
  %v1205 = vtanh.pop %v1204
  %1207 = vrot.lane.b32.xlu0 %v1205, 64
  %v1208 = vpop.permute.xlu0 %1207
  %v1210 = vmul.f32 %v1193, %v1208
  %1212 = vrot.lane.b32.xlu0 %v1210, 32
  %v1213 = vpop.permute.xlu0 %1212
  %1215 = vst.msk [vmem:[#allocation4 + $0x20] sm:$0xff] %vm170, %v1213
  %v1216 = vld [vmem:[#allocation3 + $0x28] sm:$0xff]
  %v1217 = vpack.c.bf16 %v1210, %v1210
  %1219 = vrot.lane.b32.xlu0 %v1217, 32
  %v1220 = vpop.permute.xlu0 %1219
  %v1222 = vsel %vm170, %v1220, 0
  %1224 = vmatpush.bf16.msra.mxu0 0
  %1225 = vmatpush.bf16.msra.mxu0 0
  %1226 = vmatpush.bf16.msra.mxu0 0
  %1227 = vmatpush.bf16.msra.mxu0 0
  %1228 = vmatpush.bf16.msra.mxu0 0
  %1229 = vmatpush.bf16.msra.mxu0 0
  %1230 = vmatpush.bf16.msra.mxu0 %v893
  %1231 = vmatpush.bf16.msra.mxu0 %v892
  %1232 = vmatmul.bf16.gmra.mxu0 %v1222
  %v1233 = vpop.f32.mrf.mxu0
  %v1234 = vadd.f32 0.0, %v1233
  %v1235 = vpop.f32.mrf.mxu0
  %1236 = vdwg.mxu0
  %v1237 = vadd.f32 %v1216, %v1234
  %v1238 = vxor.u32 %v1237, 2147483648
  %v1239 = vmul.f32 %v1238, 1.442695
  %v1240 = vpow.pop %v1239
  %v1241 = vadd.f32 %v1240, 1.0
  %v1242 = vrcp.pop %v1241
  %v1243 = vmul.f32 %v1241, %v1242
  %v1244 = vsub.f32 1.0, %v1243
  %v1245 = vmul.f32 %v1242, %v1244
  %v1246 = vadd.f32 %v1242, %v1245
  %vm1247 = vweird.f32 %v1241
  %vm1248 = vweird.f32 %v1242
  %vm1249 = vmor %vm1247, %vm1248
  %v1250 = vsel %vm1249, %v1242, %v1246
  %v1251 = vand.u32 2147483647, %v1241
  %vm1252 = vcmp.eq.f32.partialorder %v1251, 8.507059e+37
  %v1253 = vand.u32 %v1241, 2147483648
  %v1254 = vor.u32 1.1754944e-38, %v1253
  %v1255 = vsel %vm1252, %v1254, %v1250
  %v1256 = vmul.f32 1.0, %v1255
  %v1257 = vtanh.pop %v1237
  %v1258 = vsel %vm54, %v1257, %v1256
  %v1259 = vmul.f32 %v1258, %v1204
  %1261 = vrot.lane.b32.xlu0 %v1258, 64
  %v1262 = vpop.permute.xlu0 %1261
  %v1264 = vmul.f32 %v1258, %v1262
  %1266 = vrot.lane.b32.xlu0 %v1264, 32
  %v1267 = vpop.permute.xlu0 %1266
  %v1269 = vadd.f32 %v1259, %v1267
  %v1270 = vtanh.pop %v1269
  %1272 = vrot.lane.b32.xlu0 %v1270, 64
  %v1273 = vpop.permute.xlu0 %1272
  %v1275 = vmul.f32 %v1258, %v1273
  %1277 = vrot.lane.b32.xlu0 %v1275, 32
  %v1278 = vpop.permute.xlu0 %1277
  %1280 = vst.msk [vmem:[#allocation4 + $0x28] sm:$0xff] %vm170, %v1278
  %v1281 = vld [vmem:[#allocation3 + $0x30] sm:$0xff]
  %v1282 = vpack.c.bf16 %v1275, %v1275
  %1284 = vrot.lane.b32.xlu0 %v1282, 32
  %v1285 = vpop.permute.xlu0 %1284
  %v1287 = vsel %vm170, %v1285, 0
  %1289 = vmatpush.bf16.msra.mxu0 0
  %1290 = vmatpush.bf16.msra.mxu0 0
  %1291 = vmatpush.bf16.msra.mxu0 0
  %1292 = vmatpush.bf16.msra.mxu0 0
  %1293 = vmatpush.bf16.msra.mxu0 0
  %1294 = vmatpush.bf16.msra.mxu0 0
  %1295 = vmatpush.bf16.msra.mxu0 %v893
  %1296 = vmatpush.bf16.msra.mxu0 %v892
  %1297 = vmatmul.bf16.gmra.mxu0 %v1287
  %v1298 = vpop.f32.mrf.mxu0
  %v1299 = vadd.f32 0.0, %v1298
  %v1300 = vpop.f32.mrf.mxu0
  %1301 = vdwg.mxu0
  %v1302 = vadd.f32 %v1281, %v1299
  %v1303 = vxor.u32 %v1302, 2147483648
  %v1304 = vmul.f32 %v1303, 1.442695
  %v1305 = vpow.pop %v1304
  %v1306 = vadd.f32 %v1305, 1.0
  %v1307 = vrcp.pop %v1306
  %v1308 = vmul.f32 %v1306, %v1307
  %v1309 = vsub.f32 1.0, %v1308
  %v1310 = vmul.f32 %v1307, %v1309
  %v1311 = vadd.f32 %v1307, %v1310
  %vm1312 = vweird.f32 %v1306
  %vm1313 = vweird.f32 %v1307
  %vm1314 = vmor %vm1312, %vm1313
  %v1315 = vsel %vm1314, %v1307, %v1311
  %v1316 = vand.u32 2147483647, %v1306
  %vm1317 = vcmp.eq.f32.partialorder %v1316, 8.507059e+37
  %v1318 = vand.u32 %v1306, 2147483648
  %v1319 = vor.u32 1.1754944e-38, %v1318
  %v1320 = vsel %vm1317, %v1319, %v1315
  %v1321 = vmul.f32 1.0, %v1320
  %v1322 = vtanh.pop %v1302
  %v1323 = vsel %vm54, %v1322, %v1321
  %v1324 = vmul.f32 %v1323, %v1269
  %1326 = vrot.lane.b32.xlu0 %v1323, 64
  %v1327 = vpop.permute.xlu0 %1326
  %v1329 = vmul.f32 %v1323, %v1327
  %1331 = vrot.lane.b32.xlu0 %v1329, 32
  %v1332 = vpop.permute.xlu0 %1331
  %v1334 = vadd.f32 %v1324, %v1332
  %v1335 = vtanh.pop %v1334
  %1337 = vrot.lane.b32.xlu0 %v1335, 64
  %v1338 = vpop.permute.xlu0 %1337
  %v1340 = vmul.f32 %v1323, %v1338
  %1342 = vrot.lane.b32.xlu0 %v1340, 32
  %v1343 = vpop.permute.xlu0 %1342
  %1345 = vst.msk [vmem:[#allocation4 + $0x30] sm:$0xff] %vm170, %v1343
  %v1346 = vld [vmem:[#allocation3 + $0x38] sm:$0xff]
  %v1347 = vpack.c.bf16 %v1340, %v1340
  %1349 = vrot.lane.b32.xlu0 %v1347, 32
  %v1350 = vpop.permute.xlu0 %1349
  %v1352 = vsel %vm170, %v1350, 0
  %1354 = vmatpush.bf16.msra.mxu0 0
  %1355 = vmatpush.bf16.msra.mxu0 0
  %1356 = vmatpush.bf16.msra.mxu0 0
  %1357 = vmatpush.bf16.msra.mxu0 0
  %1358 = vmatpush.bf16.msra.mxu0 0
  %1359 = vmatpush.bf16.msra.mxu0 0
  %1360 = vmatpush.bf16.msra.mxu0 %v893
  %1361 = vmatpush.bf16.msra.mxu0 %v892
  %1362 = vmatmul.bf16.gmra.mxu0 %v1352
  %v1363 = vpop.f32.mrf.mxu0
  %v1364 = vadd.f32 0.0, %v1363
  %v1365 = vpop.f32.mrf.mxu0
  %1366 = vdwg.mxu0
  %v1367 = vadd.f32 %v1346, %v1364
  %v1368 = vxor.u32 %v1367, 2147483648
  %v1369 = vmul.f32 %v1368, 1.442695
  %v1370 = vpow.pop %v1369
  %v1371 = vadd.f32 %v1370, 1.0
  %v1372 = vrcp.pop %v1371
  %v1373 = vmul.f32 %v1371, %v1372
  %v1374 = vsub.f32 1.0, %v1373
  %v1375 = vmul.f32 %v1372, %v1374
  %v1376 = vadd.f32 %v1372, %v1375
  %vm1377 = vweird.f32 %v1371
  %vm1378 = vweird.f32 %v1372
  %vm1379 = vmor %vm1377, %vm1378
  %v1380 = vsel %vm1379, %v1372, %v1376
  %v1381 = vand.u32 2147483647, %v1371
  %vm1382 = vcmp.eq.f32.partialorder %v1381, 8.507059e+37
  %v1383 = vand.u32 %v1371, 2147483648
  %v1384 = vor.u32 1.1754944e-38, %v1383
  %v1385 = vsel %vm1382, %v1384, %v1380
  %v1386 = vmul.f32 1.0, %v1385
  %v1387 = vtanh.pop %v1367
  %v1388 = vsel %vm54, %v1387, %v1386
  %v1389 = vmul.f32 %v1388, %v1334
  %1391 = vrot.lane.b32.xlu0 %v1388, 64
  %v1392 = vpop.permute.xlu0 %1391
  %v1394 = vmul.f32 %v1388, %v1392
  %1396 = vrot.lane.b32.xlu0 %v1394, 32
  %v1397 = vpop.permute.xlu0 %1396
  %v1399 = vadd.f32 %v1389, %v1397
  %v1400 = vtanh.pop %v1399
  %1402 = vrot.lane.b32.xlu0 %v1400, 64
  %v1403 = vpop.permute.xlu0 %1402
  %v1405 = vmul.f32 %v1388, %v1403
  %1407 = vrot.lane.b32.xlu0 %v1405, 32
  %v1408 = vpop.permute.xlu0 %1407
  %1410 = vst.msk [vmem:[#allocation4 + $0x38] sm:$0xff] %vm170, %v1408
  %v1411 = vld [vmem:[#allocation3 + $0x40] sm:$0xff]
  %v1412 = vpack.c.bf16 %v1405, %v1405
  %1414 = vrot.lane.b32.xlu0 %v1412, 32
  %v1415 = vpop.permute.xlu0 %1414
  %v1417 = vsel %vm170, %v1415, 0
  %1419 = vmatpush.bf16.msra.mxu0 0
  %1420 = vmatpush.bf16.msra.mxu0 0
  %1421 = vmatpush.bf16.msra.mxu0 0
  %1422 = vmatpush.bf16.msra.mxu0 0
  %1423 = vmatpush.bf16.msra.mxu0 0
  %1424 = vmatpush.bf16.msra.mxu0 0
  %1425 = vmatpush.bf16.msra.mxu0 %v893
  %1426 = vmatpush.bf16.msra.mxu0 %v892
  %1427 = vmatmul.bf16.gmra.mxu0 %v1417
  %v1428 = vpop.f32.mrf.mxu0
  %v1429 = vadd.f32 0.0, %v1428
  %v1430 = vpop.f32.mrf.mxu0
  %1431 = vdwg.mxu0
  %v1432 = vadd.f32 %v1411, %v1429
  %v1433 = vxor.u32 %v1432, 2147483648
  %v1434 = vmul.f32 %v1433, 1.442695
  %v1435 = vpow.pop %v1434
  %v1436 = vadd.f32 %v1435, 1.0
  %v1437 = vrcp.pop %v1436
  %v1438 = vmul.f32 %v1436, %v1437
  %v1439 = vsub.f32 1.0, %v1438
  %v1440 = vmul.f32 %v1437, %v1439
  %v1441 = vadd.f32 %v1437, %v1440
  %vm1442 = vweird.f32 %v1436
  %vm1443 = vweird.f32 %v1437
  %vm1444 = vmor %vm1442, %vm1443
  %v1445 = vsel %vm1444, %v1437, %v1441
  %v1446 = vand.u32 2147483647, %v1436
  %vm1447 = vcmp.eq.f32.partialorder %v1446, 8.507059e+37
  %v1448 = vand.u32 %v1436, 2147483648
  %v1449 = vor.u32 1.1754944e-38, %v1448
  %v1450 = vsel %vm1447, %v1449, %v1445
  %v1451 = vmul.f32 1.0, %v1450
  %v1452 = vtanh.pop %v1432
  %v1453 = vsel %vm54, %v1452, %v1451
  %v1454 = vmul.f32 %v1453, %v1399
  %1456 = vrot.lane.b32.xlu0 %v1453, 64
  %v1457 = vpop.permute.xlu0 %1456
  %v1459 = vmul.f32 %v1453, %v1457
  %1461 = vrot.lane.b32.xlu0 %v1459, 32
  %v1462 = vpop.permute.xlu0 %1461
  %v1464 = vadd.f32 %v1454, %v1462
  %v1465 = vtanh.pop %v1464
  %1467 = vrot.lane.b32.xlu0 %v1465, 64
  %v1468 = vpop.permute.xlu0 %1467
  %v1470 = vmul.f32 %v1453, %v1468
  %1472 = vrot.lane.b32.xlu0 %v1470, 32
  %v1473 = vpop.permute.xlu0 %1472
  %1475 = vst.msk [vmem:[#allocation4 + $0x40] sm:$0xff] %vm170, %v1473
  %v1476 = vld [vmem:[#allocation4] sm:$0xff]
  %v1477 = vld [vmem:[#allocation4 + $0x8] sm:$0xff]
  %v1478 = vld [vmem:[#allocation4 + $0x10] sm:$0xff]
  %v1479 = vld [vmem:[#allocation4 + $0x18] sm:$0xff]
  %v1480 = vld [vmem:[#allocation4 + $0x20] sm:$0xff]
  %v1481 = vld [vmem:[#allocation4 + $0x28] sm:$0xff]
  %v1482 = vld [vmem:[#allocation4 + $0x30] sm:$0xff]
  %v1483 = vld [vmem:[#allocation4 + $0x38] sm:$0xff]
  %v1484 = vld [vmem:[#allocation4 + $0x40] sm:$0xff]
  %v1485 = vpack.c.bf16 %v1477, %v1476
  %v1486 = vpack.c.bf16 %v1479, %v1478
  %v1487 = vpack.c.bf16 %v1481, %v1480
  %v1488 = vpack.c.bf16 %v1483, %v1482
  %v1489 = vpack.c.bf16 %v1484, %v1484
  %v1490 = vld [vmem:[%s12] sm:$0xf]
  %v1491 = vld [vmem:[%s12 + $0x4] sm:$0xf]
  %v1492 = vld [vmem:[%s12 + $0x8] sm:$0xf]
  %v1493 = vld [vmem:[%s12 + $0xc] sm:$0xf]
  %v1494 = vld [vmem:[%s13] sm:$0x1]
  %v1496 = vperm.slane %v1494, 0
  %v1502 = vunpack.c.l.b16 %v1490
  %v1503 = vunpack.c.l.b16 %v1491
  %v1504 = vunpack.c.l.b16 %v1492
  %v1505 = vunpack.c.l.b16 %v1493
  %v1506 = vpack.c.b16 %v1503, %v1502
  %v1507 = vpack.c.b16 %v1505, %v1504
  %v1511 = vsel %vm170, %v1485, 0
  %v1514 = vsel %vm170, %v1486, 0
  %v1517 = vsel %vm170, %v1487, 0
  %v1520 = vsel %vm170, %v1488, 0
  %v1523 = vsel %vm170, %v1489, 0
  %1525 = vmatpush.bf16.msra.mxu0 0
  %1526 = vmatpush.bf16.msra.mxu0 0
  %1527 = vmatpush.bf16.msra.mxu0 0
  %1528 = vmatpush.bf16.msra.mxu0 0
  %1529 = vmatpush.bf16.msra.mxu0 0
  %1530 = vmatpush.bf16.msra.mxu0 0
  %1531 = vmatpush.bf16.msra.mxu0 %v1507
  %1532 = vmatpush.bf16.msra.mxu0 %v1506
  %1533 = vmatmul.bf16.gmra.mxu0 %v1511
  %v1534 = vpop.f32.mrf.mxu0
  %v1535 = vadd.f32 %v1496, %v1534
  %v1536 = vpop.f32.mrf.mxu0
  %v1537 = vadd.f32 %v1496, %v1536
  %1538 = vmatmul.bf16.gmra.mxu0 %v1514
  %v1539 = vpop.f32.mrf.mxu0
  %v1540 = vadd.f32 %v1496, %v1539
  %v1541 = vpop.f32.mrf.mxu0
  %v1542 = vadd.f32 %v1496, %v1541
  %1543 = vmatmul.bf16.gmra.mxu0 %v1517
  %v1544 = vpop.f32.mrf.mxu0
  %v1545 = vadd.f32 %v1496, %v1544
  %v1546 = vpop.f32.mrf.mxu0
  %v1547 = vadd.f32 %v1496, %v1546
  %1548 = vmatmul.bf16.gmra.mxu0 %v1520
  %v1549 = vpop.f32.mrf.mxu0
  %v1550 = vadd.f32 %v1496, %v1549
  %v1551 = vpop.f32.mrf.mxu0
  %v1552 = vadd.f32 %v1496, %v1551
  %1553 = vmatmul.bf16.gmra.mxu0 %v1523
  %v1554 = vpop.f32.mrf.mxu0
  %v1555 = vadd.f32 %v1496, %v1554
  %v1556 = vpop.f32.mrf.mxu0
  %1557 = vdwg.mxu0
  %1558 = vst [vmem:[%s14] sm:$0xff] %v1535
  %1559 = vst [vmem:[%s14 + $0x8] sm:$0xff] %v1537
  %1560 = vst [vmem:[%s14 + $0x10] sm:$0xff] %v1540
  %1561 = vst [vmem:[%s14 + $0x18] sm:$0xff] %v1542
  %1562 = vst [vmem:[%s14 + $0x20] sm:$0xff] %v1545
  %1563 = vst [vmem:[%s14 + $0x28] sm:$0xff] %v1547
  %1564 = vst [vmem:[%s14 + $0x30] sm:$0xff] %v1550
  %1565 = vst [vmem:[%s14 + $0x38] sm:$0xff] %v1552
  %1566 = vst [vmem:[%s14 + $0x40] sm:$0xff] %v1555
  %v1567 = vsel %vm170, %v1473, %v1464
  %vm1568 = vcmask 523264
  %v1569 = vsel %vm1568, %v1567, %v721
  %1570 = vst [vmem:[%s15] sm:$0xff] %v1569
  // Predicated region
  $region58: #{rvae_forward.3} parent=0 // pred_check
    _
  $region59: #{rvae_forward.3} parent=0 // pred_check_branch
    %1572 = sbr.rel (0) target = $region61
  $region60: #{rvae_forward.3} parent=0 // pred_region
    _
  $region61: #{rvae_forward.3} parent=0 // pred_fallthru
    _
  // Predicated region
  $region62: #{rvae_forward.3} parent=0 // pred_check
    _
  $region63: #{rvae_forward.3} parent=0 // pred_check_branch
    %1574 = sbr.rel (0) target = $region65
  $region64: #{rvae_forward.3} parent=0 // pred_region
    _
  $region65: #{rvae_forward.3} parent=0 // pred_fallthru
    _
  // Predicated region
  $region66: #{rvae_forward.3} parent=0 // pred_check
    _
  $region67: #{rvae_forward.3} parent=0 // pred_check_branch
    %1576 = sbr.rel (0) target = $region69
  $region68: #{rvae_forward.3} parent=0 // pred_region
    _
  $region69: #{rvae_forward.3} parent=0 // pred_fallthru
    _
  // Predicated region
  $region70: #{rvae_forward.3} parent=0 // pred_check
    _
  $region71: #{rvae_forward.3} parent=0 // pred_check_branch
    %1578 = sbr.rel (0) target = $region73
  $region72: #{rvae_forward.3} parent=0 // pred_region
    _
  $region73: #{rvae_forward.3} parent=0 // pred_fallthru
    _

</llo_original>
